<compile_context>
chip_gen: v6e
topology: v6e:2x2x1
jax: 0.10.0
libtpu: 0.0.40
codegen_flags: <defaults>
</compile_context>

<pallas_src>
import functools

import jax
import jax.numpy as jnp
from jax.experimental import pallas as pl
from jax.experimental.pallas import tpu as pltpu


def _layer_norm(v, g, b, eps):
    """PyTorch-module-style LayerNorm: gamma*(x-mean)/(std+eps)+beta with sample std
    (ddof=1) and eps added to the std (not the variance)."""
    mean = jnp.mean(v, axis=-1, keepdims=True)
    c = v - mean
    var = jnp.sum(c * c, axis=-1, keepdims=True) / (v.shape[-1] - 1)
    inv = 1.0 / (jnp.sqrt(var) + eps)          # (M,1) divide, broadcast multiply below
    return g * (c * inv) + b


def _encoder_layer_kernel(
    x_ref,              # (bt, S, H)        input block
    g1_ref, be1_ref,    # (1, H)            LayerNorm (pre-attention) gamma / beta
    wqkv_ref,           # (H, 2*Dk+Dv) bf16 fused QKV weight (query scale pre-folded)
    wo_ref,             # (Dv, H) bf16      output projection
    g2_ref, be2_ref,    # (1, H)            LayerNorm (pre-FFN) gamma / beta
    w1_ref, cb1_ref,    # (K, H, F) bf16, (1, F)   conv1 per-tap weights / bias
    w2_ref, cb2_ref,    # (K, F, H) bf16, (1, H)   conv2 per-tap weights / bias
    o_ref,              # (bt, S, H)        output block
    pad1_ref,           # (bt, S+K-1, H) bf16 VMEM halo scratch (conv1)
    pad2_ref,           # (bt, S+K-1, F) bf16 VMEM halo scratch (conv2)
    *, num_heads, kernel_size, eps,
):
    bt, S, H = x_ref.shape
    Dtot = wqkv_ref.shape[1]
    Dv = wo_ref.shape[0]
    Dk = (Dtot - Dv) // 2
    K = kernel_size
    pad_left = K // 2                 # PositionwiseFeedForward uses pad_type='both'
    pad_right = (K - 1) // 2
    M = bt * S
    bf16 = jnp.bfloat16
    f32 = jnp.float32
    dk = Dk // num_heads
    dv = Dv // num_heads

    # Fold (bt, S) -> M rows once; every matmul below runs over all M rows.
    x2 = x_ref[...].astype(f32).reshape(M, H)

    # ----------------- LayerNorm -> multi-head self-attention -----------------
    xn1 = _layer_norm(x2, g1_ref[...], be1_ref[...], eps)

    # Fused QKV projection: ONE wide (M, H) x (H, 2Dk+Dv) MXU matmul, f32 accumulation.
    qkv = jnp.dot(xn1.astype(bf16), wqkv_ref[...], preferred_element_type=f32)
    qkv_bf = qkv.astype(bf16).reshape(bt, S, Dtot)      # single bf16 cast for all heads

    # Per-head attention; contexts accumulated directly through the per-head slice of
    # the output projection (no head concat / merge relayout).
    attn = None
    for h in range(num_heads):
        q_h = qkv_bf[:, :, h * dk:(h + 1) * dk]
        k_h = qkv_bf[:, :, Dk + h * dk:Dk + (h + 1) * dk]
        v_h = qkv_bf[:, :, 2 * Dk + h * dv:2 * Dk + (h + 1) * dv]
        logits = jnp.einsum("bsd,btd->bst", q_h, k_h, preferred_element_type=f32)
        logits = logits - jnp.max(logits, axis=-1, keepdims=True)
        p = jnp.exp(logits)
        p = p * pl.reciprocal(jnp.sum(p, axis=-1, keepdims=True), approx=True)
        ctx = jnp.einsum("bst,btd->bsd", p.astype(bf16), v_h,
                         preferred_element_type=f32).reshape(M, dv)
        contrib = jnp.dot(ctx.astype(bf16), wo_ref[h * dv:(h + 1) * dv, :],
                          preferred_element_type=f32)
        attn = contrib if attn is None else attn + contrib

    # Residual 1 (layer_dropout = 0 -> identity).  Give r1 an explicit VMEM home: park
    # it in the output block so it is not kept live (spilled) across the conv FFN.
    r1 = x2 + attn
    o_ref[...] = r1.reshape(bt, S, H).astype(o_ref.dtype)

    # --------------- LayerNorm -> conv FFN (Conv3 -> ReLU -> Conv3 -> ReLU) ---------------
    xn2 = _layer_norm(r1, g2_ref[...], be2_ref[...], eps)

    def conv3(act_bf, pad_ref, w_ref, b_ref):
        # act_bf: (M, c_in) bf16.  'both' padding handled in-kernel: only the halo rows
        # are zeroed (every iteration -> megacore-safe); the interior is overwritten.
        c_in, c_out = w_ref.shape[1], w_ref.shape[2]
        if pad_left:
            pad_ref[:, :pad_left, :] = jnp.zeros((bt, pad_left, c_in), pad_ref.dtype)
        if pad_right:
            pad_ref[:, pad_left + S:, :] = jnp.zeros((bt, pad_right, c_in), pad_ref.dtype)
        pad_ref[:, pad_left:pad_left + S, :] = act_bf.reshape(bt, S, c_in)
        # K accumulated matmuls, each tap read straight from the halo scratch against
        # its (c_in, c_out) weight slab -- no (M, K*c_in) im2col materialization.
        acc = jnp.dot(pad_ref[:, 0:S, :].reshape(M, c_in), w_ref[0],
                      preferred_element_type=f32)
        for t in range(1, K):
            acc = acc + jnp.dot(pad_ref[:, t:t + S, :].reshape(M, c_in), w_ref[t],
                                preferred_element_type=f32)
        return acc + b_ref[...]

    # torchnlp's PFF loop applies ReLU after every layer, including the last one.
    h1 = jnp.maximum(conv3(xn2.astype(bf16), pad1_ref, w1_ref, cb1_ref), 0.0)   # (M, F)
    h2 = jnp.maximum(conv3(h1.astype(bf16), pad2_ref, w2_ref, cb2_ref), 0.0)    # (M, H)

    # Residual 2: read-modify-write of the output block (r1 lives there).
    o_ref[...] = o_ref[...] + h2.reshape(bt, S, H).astype(o_ref.dtype)


def encoder_layer_forward(x, params, *, num_heads, kernel_size=3, eps=1e-6,
                          batch_block=None):
    """EncoderLayer forward.

    x: [B, S, H] float32
    params:
      ln1_g, ln1_b, ln2_g, ln2_b : [H]
      wq, wk : [H, Dk]   wv : [H, Dv]   wo : [Dv, H]   (torch Linear weight, transposed)
      conv1_w: [F, H, K], conv1_b: [F]                 (torch Conv1d layout)
      conv2_w: [H, F, K], conv2_b: [H]
    """
    B, S, H = x.shape
    Dk = params["wq"].shape[1]
    Dv = params["wv"].shape[1]
    Fsz = params["conv1_w"].shape[0]
    K = kernel_size

    if batch_block is None:
        # Coarse M tiling (target a few hundred rows per step) but cap at B//2 so the
        # grid has >= 2 steps whenever B >= 2 (v7x dual-TensorCore + DMA pipelining).
        cap = min(B, max(1, 512 // S), max(1, B // 2))
        bt = 1
        for cand in range(cap, 0, -1):
            if B % cand == 0:
                bt = cand
                break
    else:
        bt = batch_block
    assert B % bt == 0

    bf16 = jnp.bfloat16
    f32 = jnp.float32
    dk = Dk // num_heads

    # One-time weight re-layout / bf16 cast (glue; hot path is inside the kernel).
    # Query scale folded into wq; QKV fused into a single matmul weight.
    wqkv = jnp.concatenate(
        [params["wq"] * (dk ** -0.5), params["wk"], params["wv"]], axis=1
    ).astype(bf16)                                                   # (H, 2*Dk+Dv)
    wo = params["wo"].astype(bf16)                                   # (Dv, H)
    w1 = jnp.transpose(params["conv1_w"], (2, 1, 0)).astype(bf16)    # (K, H, F)
    w2 = jnp.transpose(params["conv2_w"], (2, 1, 0)).astype(bf16)    # (K, F, H)
    g1 = params["ln1_g"].reshape(1, H).astype(f32)
    be1 = params["ln1_b"].reshape(1, H).astype(f32)
    g2 = params["ln2_g"].reshape(1, H).astype(f32)
    be2 = params["ln2_b"].reshape(1, H).astype(f32)
    cb1 = params["conv1_b"].reshape(1, Fsz).astype(f32)
    cb2 = params["conv2_b"].reshape(1, H).astype(f32)

    kernel = functools.partial(_encoder_layer_kernel, num_heads=num_heads,
                               kernel_size=K, eps=eps)

    rep2 = lambda i: (0, 0)          # replicated (whole-array) blocks
    rep3 = lambda i: (0, 0, 0)
    Dtot = 2 * Dk + Dv

    return pl.pallas_call(
        kernel,
        out_shape=jax.ShapeDtypeStruct((B, S, H), x.dtype),
        grid_spec=pltpu.PrefetchScalarGridSpec(
            num_scalar_prefetch=0,
            grid=(B // bt,),
            in_specs=[
                pl.BlockSpec((bt, S, H), lambda i: (i, 0, 0)),
                pl.BlockSpec((1, H), rep2), pl.BlockSpec((1, H), rep2),
                pl.BlockSpec((H, Dtot), rep2),
                pl.BlockSpec((Dv, H), rep2),
                pl.BlockSpec((1, H), rep2), pl.BlockSpec((1, H), rep2),
                pl.BlockSpec((K, H, Fsz), rep3), pl.BlockSpec((1, Fsz), rep2),
                pl.BlockSpec((K, Fsz, H), rep3), pl.BlockSpec((1, H), rep2),
            ],
            out_specs=pl.BlockSpec((bt, S, H), lambda i: (i, 0, 0)),
            scratch_shapes=[
                pltpu.VMEM((bt, S + K - 1, H), bf16),     # conv1 halo (bf16)
                pltpu.VMEM((bt, S + K - 1, Fsz), bf16),   # conv2 halo (bf16)
            ],
        ),
        compiler_params=pltpu.CompilerParams(
            dimension_semantics=("parallel",),
            vmem_limit_bytes=32 * 1024 * 1024),
    )(x, g1, be1, wqkv, wo, g2, be2, w1, cb1, w2, cb2)


def _reference(x, p, *, num_heads, eps=1e-6):
    """Plain-JAX f32 reference mirroring the PyTorch EncoderLayer semantics."""
    def ln(v, g, b):
        mean = v.mean(-1, keepdims=True)
        c = v - mean
        std = jnp.sqrt((c * c).sum(-1, keepdims=True) / (v.shape[-1] - 1))
        return g * c / (std + eps) + b

    def mha(xn):
        B, S, _ = xn.shape
        q, k, v = xn @ p["wq"], xn @ p["wk"], xn @ p["wv"]

        def split(t):
            d = t.shape[-1] // num_heads
            return t.reshape(B, S, num_heads, d).transpose(0, 2, 1, 3)

        dk = p["wq"].shape[1] // num_heads
        qh = split(q) * dk ** -0.5
        kh, vh = split(k), split(v)
        w = jax.nn.softmax(jnp.einsum("bhsd,bhtd->bhst", qh, kh), axis=-1)
        ctx = jnp.einsum("bhst,bhtd->bhsd", w, vh)
        merged = ctx.transpose(0, 2, 1, 3).reshape(B, S, -1)
        return merged @ p["wo"]

    def conv(v, w, b):               # torch Conv1d, pad_type='both'
        K = w.shape[-1]
        S = v.shape[1]
        vp = jnp.pad(v, ((0, 0), (K // 2, (K - 1) // 2), (0, 0)))
        out = b[None, None, :]
        for k in range(K):
            out = out + jnp.einsum("bsc,oc->bso", vp[:, k:k + S, :], w[:, :, k])
        return out

    xn1 = ln(x, p["ln1_g"], p["ln1_b"])
    r1 = x + mha(xn1)
    xn2 = ln(r1, p["ln2_g"], p["ln2_b"])
    h = jax.nn.relu(conv(xn2, p["conv1_w"], p["conv1_b"]))
    y = jax.nn.relu(conv(h, p["conv2_w"], p["conv2_b"]))
    return r1 + y


if __name__ == "__main__":
    # EncoderLayer(hidden_size, total_key_depth, total_value_depth, filter_size, num_heads)
    # Lane-dense small config: hidden/key/value depth 128, filter 256, 4 heads.
    batch, seq = 2, 8
    hidden, key_depth, value_depth, filter_size, num_heads = 128, 128, 128, 256, 4
    K = 3   # conv width fixed by PositionwiseFeedForward('cc')

    root = jax.random.PRNGKey(0)
    ks = jax.random.split(root, 10)

    def uinit(k, fan_in, shape):      # torch nn.Linear / nn.Conv1d default-style init
        bound = 1.0 / (fan_in ** 0.5)
        return jax.random.uniform(k, shape, jnp.float32, -bound, bound)

    x = jax.random.normal(ks[0], (batch, seq, hidden), jnp.float32)
    params = dict(
        ln1_g=jnp.ones((hidden,), jnp.float32),
        ln1_b=jnp.zeros((hidden,), jnp.float32),
        wq=uinit(ks[1], hidden, (hidden, key_depth)),
        wk=uinit(ks[2], hidden, (hidden, key_depth)),
        wv=uinit(ks[3], hidden, (hidden, value_depth)),
        wo=uinit(ks[4], value_depth, (value_depth, hidden)),
        ln2_g=jnp.ones((hidden,), jnp.float32),
        ln2_b=jnp.zeros((hidden,), jnp.float32),
        conv1_w=uinit(ks[5], hidden * K, (filter_size, hidden, K)),
        conv1_b=uinit(ks[6], hidden * K, (filter_size,)),
        conv2_w=uinit(ks[7], filter_size * K, (hidden, filter_size, K)),
        conv2_b=uinit(ks[8], filter_size * K, (hidden,)),
    )

    out = encoder_layer_forward(x, params, num_heads=num_heads, kernel_size=K)
    out = jax.block_until_ready(out)

    ref = _reference(x, params, num_heads=num_heads)
    assert out.shape == (batch, seq, hidden)
    # Kernel uses bf16 MXU operands with f32 accumulation (plus an approx-reciprocal
    # softmax denominator) vs a pure-f32 reference.
    err = float(jnp.max(jnp.abs(out - ref)))
    assert jnp.allclose(out, ref, atol=2e-2, rtol=2e-2), err

    print("KERNEL_OK")
</pallas_src>

<mosaic_0001>
module attributes {stable_mosaic.version = 11 : i64} {
  func.func @_encoder_layer_kernel(%arg0: i32, %arg1: memref<1x8x128xf32, #tpu.memory_space<vmem>>, %arg2: memref<1x128xf32, #tpu.memory_space<vmem>>, %arg3: memref<1x128xf32, #tpu.memory_space<vmem>>, %arg4: memref<128x384xbf16, #tpu.memory_space<vmem>>, %arg5: memref<128x128xbf16, #tpu.memory_space<vmem>>, %arg6: memref<1x128xf32, #tpu.memory_space<vmem>>, %arg7: memref<1x128xf32, #tpu.memory_space<vmem>>, %arg8: memref<3x128x256xbf16, #tpu.memory_space<vmem>>, %arg9: memref<1x256xf32, #tpu.memory_space<vmem>>, %arg10: memref<3x256x128xbf16, #tpu.memory_space<vmem>>, %arg11: memref<1x128xf32, #tpu.memory_space<vmem>>, %arg12: memref<1x8x128xf32, #tpu.memory_space<vmem>>, %arg13: memref<1x10x128xbf16, #tpu.memory_space<vmem>>, %arg14: memref<1x10x256xbf16, #tpu.memory_space<vmem>>) attributes {dimension_semantics = [#tpu.dimension_semantics<parallel>], iteration_bounds = array<i64: 2>, scalar_prefetch = 0 : i64, scratch_operands = 2 : i64, tpu.core_type = #tpu.core_type<tc>, window_params = [{transform_indices = @transform_0, window_bounds = array<i64: 1, 8, 128>}, {pipeline_mode = #tpu.pipeline_mode<synchronous>, transform_indices = @transform_1, window_bounds = array<i64: 1, 128>}, {pipeline_mode = #tpu.pipeline_mode<synchronous>, transform_indices = @transform_2, window_bounds = array<i64: 1, 128>}, {pipeline_mode = #tpu.pipeline_mode<synchronous>, transform_indices = @transform_3, window_bounds = array<i64: 128, 384>}, {pipeline_mode = #tpu.pipeline_mode<synchronous>, transform_indices = @transform_4, window_bounds = array<i64: 128, 128>}, {pipeline_mode = #tpu.pipeline_mode<synchronous>, transform_indices = @transform_5, window_bounds = array<i64: 1, 128>}, {pipeline_mode = #tpu.pipeline_mode<synchronous>, transform_indices = @transform_6, window_bounds = array<i64: 1, 128>}, {pipeline_mode = #tpu.pipeline_mode<synchronous>, transform_indices = @transform_7, window_bounds = array<i64: 3, 128, 256>}, {pipeline_mode = #tpu.pipeline_mode<synchronous>, transform_indices = @transform_8, window_bounds = array<i64: 1, 256>}, {pipeline_mode = #tpu.pipeline_mode<synchronous>, transform_indices = @transform_9, window_bounds = array<i64: 3, 256, 128>}, {pipeline_mode = #tpu.pipeline_mode<synchronous>, transform_indices = @transform_10, window_bounds = array<i64: 1, 128>}, {transform_indices = @transform_11, window_bounds = array<i64: 1, 8, 128>}]} {
    %c0 = arith.constant 0 : index
    %c0_0 = arith.constant 0 : index
    %c0_1 = arith.constant 0 : index
    %0 = vector.load %arg1[%c0, %c0_0, %c0_1] : memref<1x8x128xf32, #tpu.memory_space<vmem>>, vector<1x8x128xf32>
    %1 = vector.shape_cast %0 : vector<1x8x128xf32> to vector<8x128xf32>
    %c0_2 = arith.constant 0 : index
    %c0_3 = arith.constant 0 : index
    %2 = vector.load %arg2[%c0_2, %c0_3] : memref<1x128xf32, #tpu.memory_space<vmem>>, vector<1x128xf32>
    %c0_4 = arith.constant 0 : index
    %c0_5 = arith.constant 0 : index
    %3 = vector.load %arg3[%c0_4, %c0_5] : memref<1x128xf32, #tpu.memory_space<vmem>>, vector<1x128xf32>
    %cst = arith.constant dense<0.000000e+00> : vector<8xf32>
    %4 = vector.multi_reduction <add>, %1, %cst [1] : vector<8x128xf32> to vector<8xf32>
    %5 = vector.shape_cast %4 : vector<8xf32> to vector<8x1xf32>
    %cst_6 = arith.constant 1.280000e+02 : f32
    %6 = vector.broadcast %cst_6 : f32 to vector<8x1xf32>
    %7 = arith.divf %5, %6 : vector<8x1xf32>
    %8 = vector.broadcast %7 : vector<8x1xf32> to vector<8x128xf32>
    %9 = arith.subf %1, %8 : vector<8x128xf32>
    %10 = arith.mulf %9, %9 : vector<8x128xf32>
    %cst_7 = arith.constant dense<0.000000e+00> : vector<8xf32>
    %11 = vector.multi_reduction <add>, %10, %cst_7 [1] : vector<8x128xf32> to vector<8xf32>
    %12 = vector.shape_cast %11 : vector<8xf32> to vector<8x1xf32>
    %cst_8 = arith.constant 1.270000e+02 : f32
    %13 = vector.broadcast %cst_8 : f32 to vector<8x1xf32>
    %14 = arith.divf %12, %13 : vector<8x1xf32>
    %15 = math.sqrt %14 : vector<8x1xf32>
    %cst_9 = arith.constant 9.99999997E-7 : f32
    %16 = vector.broadcast %cst_9 : f32 to vector<8x1xf32>
    %17 = arith.addf %15, %16 : vector<8x1xf32>
    %cst_10 = arith.constant 1.000000e+00 : f32
    %18 = vector.broadcast %cst_10 : f32 to vector<8x1xf32>
    %19 = arith.divf %18, %17 : vector<8x1xf32>
    %20 = vector.broadcast %19 : vector<8x1xf32> to vector<8x128xf32>
    %21 = arith.mulf %9, %20 : vector<8x128xf32>
    %22 = vector.broadcast %2 : vector<1x128xf32> to vector<8x128xf32>
    %23 = arith.mulf %22, %21 : vector<8x128xf32>
    %24 = vector.broadcast %3 : vector<1x128xf32> to vector<8x128xf32>
    %25 = arith.addf %23, %24 : vector<8x128xf32>
    %26 = arith.truncf %25 : vector<8x128xf32> to vector<8x128xbf16>
    %c0_11 = arith.constant 0 : index
    %c0_12 = arith.constant 0 : index
    %27 = vector.load %arg4[%c0_11, %c0_12] : memref<128x384xbf16, #tpu.memory_space<vmem>>, vector<128x384xbf16>
    %cst_13 = arith.constant dense<0.000000e+00> : vector<8x384xf32>
    %28 = tpu.matmul %26, %27, %cst_13 {dimension_numbers = #tpu.dot_dimension_numbers<[1], [0], [0], [1], [0, 0, 1, 1], [], []>} : vector<8x128xbf16>, vector<128x384xbf16>, vector<8x384xf32> -> vector<8x384xf32>
    %29 = arith.truncf %28 : vector<8x384xf32> to vector<8x384xbf16>
    %30 = vector.shape_cast %29 : vector<8x384xbf16> to vector<1x8x384xbf16>
    %31 = vector.extract_strided_slice %30 {offsets = [0, 0, 0], sizes = [1, 8, 32], strides = [1, 1, 1]} : vector<1x8x384xbf16> to vector<1x8x32xbf16>
    %32 = vector.extract_strided_slice %30 {offsets = [0, 0, 128], sizes = [1, 8, 32], strides = [1, 1, 1]} : vector<1x8x384xbf16> to vector<1x8x32xbf16>
    %33 = vector.extract_strided_slice %30 {offsets = [0, 0, 256], sizes = [1, 8, 32], strides = [1, 1, 1]} : vector<1x8x384xbf16> to vector<1x8x32xbf16>
    "tpu.trace_start"() <{level = 10 : i32, message = "bsd,btd->bst"}> : () -> ()
    %cst_14 = arith.constant dense<0.000000e+00> : vector<1x8x8xf32>
    %34 = tpu.matmul %31, %32, %cst_14 {dimension_numbers = #tpu.dot_dimension_numbers<[2], [2], [1], [1], [0, 0, 0, 1, 1, 1], [0], [0]>} : vector<1x8x32xbf16>, vector<1x8x32xbf16>, vector<1x8x8xf32> -> vector<1x8x8xf32>
    "tpu.trace_stop"() : () -> ()
    %cst_15 = arith.constant dense<0xFF800000> : vector<1x8xf32>
    %35 = vector.multi_reduction <maximumf>, %34, %cst_15 [2] : vector<1x8x8xf32> to vector<1x8xf32>
    %36 = vector.shape_cast %35 : vector<1x8xf32> to vector<1x8x1xf32>
    %37 = vector.broadcast %36 : vector<1x8x1xf32> to vector<1x8x8xf32>
    %38 = arith.subf %34, %37 : vector<1x8x8xf32>
    %39 = math.exp %38 : vector<1x8x8xf32>
    %cst_16 = arith.constant dense<0.000000e+00> : vector<1x8xf32>
    %40 = vector.multi_reduction <add>, %39, %cst_16 [2] : vector<1x8x8xf32> to vector<1x8xf32>
    %41 = vector.shape_cast %40 : vector<1x8xf32> to vector<1x8x1xf32>
    %42 = tpu.reciprocal %41 {approx = true} : vector<1x8x1xf32> -> vector<1x8x1xf32>
    %43 = vector.broadcast %42 : vector<1x8x1xf32> to vector<1x8x8xf32>
    %44 = arith.mulf %39, %43 : vector<1x8x8xf32>
    %45 = arith.truncf %44 : vector<1x8x8xf32> to vector<1x8x8xbf16>
    "tpu.trace_start"() <{level = 10 : i32, message = "bst,btd->bsd"}> : () -> ()
    %cst_17 = arith.constant dense<0.000000e+00> : vector<1x8x32xf32>
    %46 = tpu.matmul %45, %33, %cst_17 {dimension_numbers = #tpu.dot_dimension_numbers<[2], [1], [1], [2], [0, 0, 0, 1, 1, 2], [0], [0]>} : vector<1x8x8xbf16>, vector<1x8x32xbf16>, vector<1x8x32xf32> -> vector<1x8x32xf32>
    "tpu.trace_stop"() : () -> ()
    %47 = vector.shape_cast %46 : vector<1x8x32xf32> to vector<8x32xf32>
    %48 = arith.truncf %47 : vector<8x32xf32> to vector<8x32xbf16>
    %c0_18 = arith.constant 0 : index
    %c0_19 = arith.constant 0 : index
    %49 = vector.load %arg5[%c0_18, %c0_19] : memref<128x128xbf16, #tpu.memory_space<vmem>>, vector<32x128xbf16>
    %cst_20 = arith.constant dense<0.000000e+00> : vector<8x128xf32>
    %50 = tpu.matmul %48, %49, %cst_20 {dimension_numbers = #tpu.dot_dimension_numbers<[1], [0], [0], [1], [0, 0, 1, 1], [], []>} : vector<8x32xbf16>, vector<32x128xbf16>, vector<8x128xf32> -> vector<8x128xf32>
    %51 = vector.extract_strided_slice %30 {offsets = [0, 0, 32], sizes = [1, 8, 32], strides = [1, 1, 1]} : vector<1x8x384xbf16> to vector<1x8x32xbf16>
    %52 = vector.extract_strided_slice %30 {offsets = [0, 0, 160], sizes = [1, 8, 32], strides = [1, 1, 1]} : vector<1x8x384xbf16> to vector<1x8x32xbf16>
    %53 = vector.extract_strided_slice %30 {offsets = [0, 0, 288], sizes = [1, 8, 32], strides = [1, 1, 1]} : vector<1x8x384xbf16> to vector<1x8x32xbf16>
    "tpu.trace_start"() <{level = 10 : i32, message = "bsd,btd->bst"}> : () -> ()
    %cst_21 = arith.constant dense<0.000000e+00> : vector<1x8x8xf32>
    %54 = tpu.matmul %51, %52, %cst_21 {dimension_numbers = #tpu.dot_dimension_numbers<[2], [2], [1], [1], [0, 0, 0, 1, 1, 1], [0], [0]>} : vector<1x8x32xbf16>, vector<1x8x32xbf16>, vector<1x8x8xf32> -> vector<1x8x8xf32>
    "tpu.trace_stop"() : () -> ()
    %cst_22 = arith.constant dense<0xFF800000> : vector<1x8xf32>
    %55 = vector.multi_reduction <maximumf>, %54, %cst_22 [2] : vector<1x8x8xf32> to vector<1x8xf32>
    %56 = vector.shape_cast %55 : vector<1x8xf32> to vector<1x8x1xf32>
    %57 = vector.broadcast %56 : vector<1x8x1xf32> to vector<1x8x8xf32>
    %58 = arith.subf %54, %57 : vector<1x8x8xf32>
    %59 = math.exp %58 : vector<1x8x8xf32>
    %cst_23 = arith.constant dense<0.000000e+00> : vector<1x8xf32>
    %60 = vector.multi_reduction <add>, %59, %cst_23 [2] : vector<1x8x8xf32> to vector<1x8xf32>
    %61 = vector.shape_cast %60 : vector<1x8xf32> to vector<1x8x1xf32>
    %62 = tpu.reciprocal %61 {approx = true} : vector<1x8x1xf32> -> vector<1x8x1xf32>
    %63 = vector.broadcast %62 : vector<1x8x1xf32> to vector<1x8x8xf32>
    %64 = arith.mulf %59, %63 : vector<1x8x8xf32>
    %65 = arith.truncf %64 : vector<1x8x8xf32> to vector<1x8x8xbf16>
    "tpu.trace_start"() <{level = 10 : i32, message = "bst,btd->bsd"}> : () -> ()
    %cst_24 = arith.constant dense<0.000000e+00> : vector<1x8x32xf32>
    %66 = tpu.matmul %65, %53, %cst_24 {dimension_numbers = #tpu.dot_dimension_numbers<[2], [1], [1], [2], [0, 0, 0, 1, 1, 2], [0], [0]>} : vector<1x8x8xbf16>, vector<1x8x32xbf16>, vector<1x8x32xf32> -> vector<1x8x32xf32>
    "tpu.trace_stop"() : () -> ()
    %67 = vector.shape_cast %66 : vector<1x8x32xf32> to vector<8x32xf32>
    %68 = arith.truncf %67 : vector<8x32xf32> to vector<8x32xbf16>
    %c32 = arith.constant 32 : index
    %c0_25 = arith.constant 0 : index
    %69 = vector.load %arg5[%c32, %c0_25] : memref<128x128xbf16, #tpu.memory_space<vmem>>, vector<32x128xbf16>
    %cst_26 = arith.constant dense<0.000000e+00> : vector<8x128xf32>
    %70 = tpu.matmul %68, %69, %cst_26 {dimension_numbers = #tpu.dot_dimension_numbers<[1], [0], [0], [1], [0, 0, 1, 1], [], []>} : vector<8x32xbf16>, vector<32x128xbf16>, vector<8x128xf32> -> vector<8x128xf32>
    %71 = arith.addf %50, %70 : vector<8x128xf32>
    %72 = vector.extract_strided_slice %30 {offsets = [0, 0, 64], sizes = [1, 8, 32], strides = [1, 1, 1]} : vector<1x8x384xbf16> to vector<1x8x32xbf16>
    %73 = vector.extract_strided_slice %30 {offsets = [0, 0, 192], sizes = [1, 8, 32], strides = [1, 1, 1]} : vector<1x8x384xbf16> to vector<1x8x32xbf16>
    %74 = vector.extract_strided_slice %30 {offsets = [0, 0, 320], sizes = [1, 8, 32], strides = [1, 1, 1]} : vector<1x8x384xbf16> to vector<1x8x32xbf16>
    "tpu.trace_start"() <{level = 10 : i32, message = "bsd,btd->bst"}> : () -> ()
    %cst_27 = arith.constant dense<0.000000e+00> : vector<1x8x8xf32>
    %75 = tpu.matmul %72, %73, %cst_27 {dimension_numbers = #tpu.dot_dimension_numbers<[2], [2], [1], [1], [0, 0, 0, 1, 1, 1], [0], [0]>} : vector<1x8x32xbf16>, vector<1x8x32xbf16>, vector<1x8x8xf32> -> vector<1x8x8xf32>
    "tpu.trace_stop"() : () -> ()
    %cst_28 = arith.constant dense<0xFF800000> : vector<1x8xf32>
    %76 = vector.multi_reduction <maximumf>, %75, %cst_28 [2] : vector<1x8x8xf32> to vector<1x8xf32>
    %77 = vector.shape_cast %76 : vector<1x8xf32> to vector<1x8x1xf32>
    %78 = vector.broadcast %77 : vector<1x8x1xf32> to vector<1x8x8xf32>
    %79 = arith.subf %75, %78 : vector<1x8x8xf32>
    %80 = math.exp %79 : vector<1x8x8xf32>
    %cst_29 = arith.constant dense<0.000000e+00> : vector<1x8xf32>
    %81 = vector.multi_reduction <add>, %80, %cst_29 [2] : vector<1x8x8xf32> to vector<1x8xf32>
    %82 = vector.shape_cast %81 : vector<1x8xf32> to vector<1x8x1xf32>
    %83 = tpu.reciprocal %82 {approx = true} : vector<1x8x1xf32> -> vector<1x8x1xf32>
    %84 = vector.broadcast %83 : vector<1x8x1xf32> to vector<1x8x8xf32>
    %85 = arith.mulf %80, %84 : vector<1x8x8xf32>
    %86 = arith.truncf %85 : vector<1x8x8xf32> to vector<1x8x8xbf16>
    "tpu.trace_start"() <{level = 10 : i32, message = "bst,btd->bsd"}> : () -> ()
    %cst_30 = arith.constant dense<0.000000e+00> : vector<1x8x32xf32>
    %87 = tpu.matmul %86, %74, %cst_30 {dimension_numbers = #tpu.dot_dimension_numbers<[2], [1], [1], [2], [0, 0, 0, 1, 1, 2], [0], [0]>} : vector<1x8x8xbf16>, vector<1x8x32xbf16>, vector<1x8x32xf32> -> vector<1x8x32xf32>
    "tpu.trace_stop"() : () -> ()
    %88 = vector.shape_cast %87 : vector<1x8x32xf32> to vector<8x32xf32>
    %89 = arith.truncf %88 : vector<8x32xf32> to vector<8x32xbf16>
    %c64 = arith.constant 64 : index
    %c0_31 = arith.constant 0 : index
    %90 = vector.load %arg5[%c64, %c0_31] : memref<128x128xbf16, #tpu.memory_space<vmem>>, vector<32x128xbf16>
    %cst_32 = arith.constant dense<0.000000e+00> : vector<8x128xf32>
    %91 = tpu.matmul %89, %90, %cst_32 {dimension_numbers = #tpu.dot_dimension_numbers<[1], [0], [0], [1], [0, 0, 1, 1], [], []>} : vector<8x32xbf16>, vector<32x128xbf16>, vector<8x128xf32> -> vector<8x128xf32>
    %92 = arith.addf %71, %91 : vector<8x128xf32>
    %93 = vector.extract_strided_slice %30 {offsets = [0, 0, 96], sizes = [1, 8, 32], strides = [1, 1, 1]} : vector<1x8x384xbf16> to vector<1x8x32xbf16>
    %94 = vector.extract_strided_slice %30 {offsets = [0, 0, 224], sizes = [1, 8, 32], strides = [1, 1, 1]} : vector<1x8x384xbf16> to vector<1x8x32xbf16>
    %95 = vector.extract_strided_slice %30 {offsets = [0, 0, 352], sizes = [1, 8, 32], strides = [1, 1, 1]} : vector<1x8x384xbf16> to vector<1x8x32xbf16>
    "tpu.trace_start"() <{level = 10 : i32, message = "bsd,btd->bst"}> : () -> ()
    %cst_33 = arith.constant dense<0.000000e+00> : vector<1x8x8xf32>
    %96 = tpu.matmul %93, %94, %cst_33 {dimension_numbers = #tpu.dot_dimension_numbers<[2], [2], [1], [1], [0, 0, 0, 1, 1, 1], [0], [0]>} : vector<1x8x32xbf16>, vector<1x8x32xbf16>, vector<1x8x8xf32> -> vector<1x8x8xf32>
    "tpu.trace_stop"() : () -> ()
    %cst_34 = arith.constant dense<0xFF800000> : vector<1x8xf32>
    %97 = vector.multi_reduction <maximumf>, %96, %cst_34 [2] : vector<1x8x8xf32> to vector<1x8xf32>
    %98 = vector.shape_cast %97 : vector<1x8xf32> to vector<1x8x1xf32>
    %99 = vector.broadcast %98 : vector<1x8x1xf32> to vector<1x8x8xf32>
    %100 = arith.subf %96, %99 : vector<1x8x8xf32>
    %101 = math.exp %100 : vector<1x8x8xf32>
    %cst_35 = arith.constant dense<0.000000e+00> : vector<1x8xf32>
    %102 = vector.multi_reduction <add>, %101, %cst_35 [2] : vector<1x8x8xf32> to vector<1x8xf32>
    %103 = vector.shape_cast %102 : vector<1x8xf32> to vector<1x8x1xf32>
    %104 = tpu.reciprocal %103 {approx = true} : vector<1x8x1xf32> -> vector<1x8x1xf32>
    %105 = vector.broadcast %104 : vector<1x8x1xf32> to vector<1x8x8xf32>
    %106 = arith.mulf %101, %105 : vector<1x8x8xf32>
    %107 = arith.truncf %106 : vector<1x8x8xf32> to vector<1x8x8xbf16>
    "tpu.trace_start"() <{level = 10 : i32, message = "bst,btd->bsd"}> : () -> ()
    %cst_36 = arith.constant dense<0.000000e+00> : vector<1x8x32xf32>
    %108 = tpu.matmul %107, %95, %cst_36 {dimension_numbers = #tpu.dot_dimension_numbers<[2], [1], [1], [2], [0, 0, 0, 1, 1, 2], [0], [0]>} : vector<1x8x8xbf16>, vector<1x8x32xbf16>, vector<1x8x32xf32> -> vector<1x8x32xf32>
    "tpu.trace_stop"() : () -> ()
    %109 = vector.shape_cast %108 : vector<1x8x32xf32> to vector<8x32xf32>
    %110 = arith.truncf %109 : vector<8x32xf32> to vector<8x32xbf16>
    %c96 = arith.constant 96 : index
    %c0_37 = arith.constant 0 : index
    %111 = vector.load %arg5[%c96, %c0_37] : memref<128x128xbf16, #tpu.memory_space<vmem>>, vector<32x128xbf16>
    %cst_38 = arith.constant dense<0.000000e+00> : vector<8x128xf32>
    %112 = tpu.matmul %110, %111, %cst_38 {dimension_numbers = #tpu.dot_dimension_numbers<[1], [0], [0], [1], [0, 0, 1, 1], [], []>} : vector<8x32xbf16>, vector<32x128xbf16>, vector<8x128xf32> -> vector<8x128xf32>
    %113 = arith.addf %92, %112 : vector<8x128xf32>
    %114 = arith.addf %1, %113 : vector<8x128xf32>
    %115 = vector.shape_cast %114 : vector<8x128xf32> to vector<1x8x128xf32>
    %c0_39 = arith.constant 0 : index
    %c0_40 = arith.constant 0 : index
    %c0_41 = arith.constant 0 : index
    %116 = vector.load %arg12[%c0_39, %c0_40, %c0_41] : memref<1x8x128xf32, #tpu.memory_space<vmem>>, vector<1x8x128xf32>
    tpu.vector_store %arg12[%c0_39, %c0_40, %c0_41], %115 {strides = array<i32>} : memref<1x8x128xf32, #tpu.memory_space<vmem>>, vector<1x8x128xf32>,
    %c0_42 = arith.constant 0 : index
    %c0_43 = arith.constant 0 : index
    %117 = vector.load %arg6[%c0_42, %c0_43] : memref<1x128xf32, #tpu.memory_space<vmem>>, vector<1x128xf32>
    %c0_44 = arith.constant 0 : index
    %c0_45 = arith.constant 0 : index
    %118 = vector.load %arg7[%c0_44, %c0_45] : memref<1x128xf32, #tpu.memory_space<vmem>>, vector<1x128xf32>
    %cst_46 = arith.constant dense<0.000000e+00> : vector<8xf32>
    %119 = vector.multi_reduction <add>, %114, %cst_46 [1] : vector<8x128xf32> to vector<8xf32>
    %120 = vector.shape_cast %119 : vector<8xf32> to vector<8x1xf32>
    %cst_47 = arith.constant 1.280000e+02 : f32
    %121 = vector.broadcast %cst_47 : f32 to vector<8x1xf32>
    %122 = arith.divf %120, %121 : vector<8x1xf32>
    %123 = vector.broadcast %122 : vector<8x1xf32> to vector<8x128xf32>
    %124 = arith.subf %114, %123 : vector<8x128xf32>
    %125 = arith.mulf %124, %124 : vector<8x128xf32>
    %cst_48 = arith.constant dense<0.000000e+00> : vector<8xf32>
    %126 = vector.multi_reduction <add>, %125, %cst_48 [1] : vector<8x128xf32> to vector<8xf32>
    %127 = vector.shape_cast %126 : vector<8xf32> to vector<8x1xf32>
    %cst_49 = arith.constant 1.270000e+02 : f32
    %128 = vector.broadcast %cst_49 : f32 to vector<8x1xf32>
    %129 = arith.divf %127, %128 : vector<8x1xf32>
    %130 = math.sqrt %129 : vector<8x1xf32>
    %cst_50 = arith.constant 9.99999997E-7 : f32
    %131 = vector.broadcast %cst_50 : f32 to vector<8x1xf32>
    %132 = arith.addf %130, %131 : vector<8x1xf32>
    %cst_51 = arith.constant 1.000000e+00 : f32
    %133 = vector.broadcast %cst_51 : f32 to vector<8x1xf32>
    %134 = arith.divf %133, %132 : vector<8x1xf32>
    %135 = vector.broadcast %134 : vector<8x1xf32> to vector<8x128xf32>
    %136 = arith.mulf %124, %135 : vector<8x128xf32>
    %137 = vector.broadcast %117 : vector<1x128xf32> to vector<8x128xf32>
    %138 = arith.mulf %137, %136 : vector<8x128xf32>
    %139 = vector.broadcast %118 : vector<1x128xf32> to vector<8x128xf32>
    %140 = arith.addf %138, %139 : vector<8x128xf32>
    %141 = arith.truncf %140 : vector<8x128xf32> to vector<8x128xbf16>
    %cst_52 = arith.constant 0.000000e+00 : bf16
    %142 = vector.broadcast %cst_52 : bf16 to vector<1x1x128xbf16>
    %c0_53 = arith.constant 0 : index
    %c0_54 = arith.constant 0 : index
    %c0_55 = arith.constant 0 : index
    %143 = vector.load %arg13[%c0_53, %c0_54, %c0_55] : memref<1x10x128xbf16, #tpu.memory_space<vmem>>, vector<1x1x128xbf16>
    tpu.vector_store %arg13[%c0_53, %c0_54, %c0_55], %142 {strides = array<i32>} : memref<1x10x128xbf16, #tpu.memory_space<vmem>>, vector<1x1x128xbf16>,
    %cst_56 = arith.constant 0.000000e+00 : bf16
    %144 = vector.broadcast %cst_56 : bf16 to vector<1x1x128xbf16>
    %c0_57 = arith.constant 0 : index
    %c9 = arith.constant 9 : index
    %c0_58 = arith.constant 0 : index
    %145 = vector.load %arg13[%c0_57, %c9, %c0_58] : memref<1x10x128xbf16, #tpu.memory_space<vmem>>, vector<1x1x128xbf16>
    tpu.vector_store %arg13[%c0_57, %c9, %c0_58], %144 {strides = array<i32>} : memref<1x10x128xbf16, #tpu.memory_space<vmem>>, vector<1x1x128xbf16>,
    %146 = vector.shape_cast %141 : vector<8x128xbf16> to vector<1x8x128xbf16>
    %c0_59 = arith.constant 0 : index
    %c1 = arith.constant 1 : index
    %c0_60 = arith.constant 0 : index
    %147 = vector.load %arg13[%c0_59, %c1, %c0_60] : memref<1x10x128xbf16, #tpu.memory_space<vmem>>, vector<1x8x128xbf16>
    tpu.vector_store %arg13[%c0_59, %c1, %c0_60], %146 {strides = array<i32>} : memref<1x10x128xbf16, #tpu.memory_space<vmem>>, vector<1x8x128xbf16>,
    %c0_61 = arith.constant 0 : index
    %c0_62 = arith.constant 0 : index
    %c0_63 = arith.constant 0 : index
    %148 = vector.load %arg13[%c0_61, %c0_62, %c0_63] : memref<1x10x128xbf16, #tpu.memory_space<vmem>>, vector<1x8x128xbf16>
    %149 = vector.shape_cast %148 : vector<1x8x128xbf16> to vector<8x128xbf16>
    %c0_64 = arith.constant 0 : index
    %c0_65 = arith.constant 0 : index
    %c0_66 = arith.constant 0 : index
    %150 = vector.load %arg8[%c0_64, %c0_65, %c0_66] : memref<3x128x256xbf16, #tpu.memory_space<vmem>>, vector<1x128x256xbf16>
    %151 = vector.shape_cast %150 : vector<1x128x256xbf16> to vector<128x256xbf16>
    %cst_67 = arith.constant dense<0.000000e+00> : vector<8x256xf32>
    %152 = tpu.matmul %149, %151, %cst_67 {dimension_numbers = #tpu.dot_dimension_numbers<[1], [0], [0], [1], [0, 0, 1, 1], [], []>} : vector<8x128xbf16>, vector<128x256xbf16>, vector<8x256xf32> -> vector<8x256xf32>
    %c0_68 = arith.constant 0 : index
    %c1_69 = arith.constant 1 : index
    %c0_70 = arith.constant 0 : index
    %153 = vector.load %arg13[%c0_68, %c1_69, %c0_70] : memref<1x10x128xbf16, #tpu.memory_space<vmem>>, vector<1x8x128xbf16>
    %154 = vector.shape_cast %153 : vector<1x8x128xbf16> to vector<8x128xbf16>
    %c1_71 = arith.constant 1 : index
    %c0_72 = arith.constant 0 : index
    %c0_73 = arith.constant 0 : index
    %155 = vector.load %arg8[%c1_71, %c0_72, %c0_73] : memref<3x128x256xbf16, #tpu.memory_space<vmem>>, vector<1x128x256xbf16>
    %156 = vector.shape_cast %155 : vector<1x128x256xbf16> to vector<128x256xbf16>
    %cst_74 = arith.constant dense<0.000000e+00> : vector<8x256xf32>
    %157 = tpu.matmul %154, %156, %cst_74 {dimension_numbers = #tpu.dot_dimension_numbers<[1], [0], [0], [1], [0, 0, 1, 1], [], []>} : vector<8x128xbf16>, vector<128x256xbf16>, vector<8x256xf32> -> vector<8x256xf32>
    %158 = arith.addf %152, %157 : vector<8x256xf32>
    %c0_75 = arith.constant 0 : index
    %c2 = arith.constant 2 : index
    %c0_76 = arith.constant 0 : index
    %159 = vector.load %arg13[%c0_75, %c2, %c0_76] : memref<1x10x128xbf16, #tpu.memory_space<vmem>>, vector<1x8x128xbf16>
    %160 = vector.shape_cast %159 : vector<1x8x128xbf16> to vector<8x128xbf16>
    %c2_77 = arith.constant 2 : index
    %c0_78 = arith.constant 0 : index
    %c0_79 = arith.constant 0 : index
    %161 = vector.load %arg8[%c2_77, %c0_78, %c0_79] : memref<3x128x256xbf16, #tpu.memory_space<vmem>>, vector<1x128x256xbf16>
    %162 = vector.shape_cast %161 : vector<1x128x256xbf16> to vector<128x256xbf16>
    %cst_80 = arith.constant dense<0.000000e+00> : vector<8x256xf32>
    %163 = tpu.matmul %160, %162, %cst_80 {dimension_numbers = #tpu.dot_dimension_numbers<[1], [0], [0], [1], [0, 0, 1, 1], [], []>} : vector<8x128xbf16>, vector<128x256xbf16>, vector<8x256xf32> -> vector<8x256xf32>
    %164 = arith.addf %158, %163 : vector<8x256xf32>
    %c0_81 = arith.constant 0 : index
    %c0_82 = arith.constant 0 : index
    %165 = vector.load %arg9[%c0_81, %c0_82] : memref<1x256xf32, #tpu.memory_space<vmem>>, vector<1x256xf32>
    %166 = vector.broadcast %165 : vector<1x256xf32> to vector<8x256xf32>
    %167 = arith.addf %164, %166 : vector<8x256xf32>
    %cst_83 = arith.constant 0.000000e+00 : f32
    %168 = vector.broadcast %cst_83 : f32 to vector<8x256xf32>
    %169 = arith.maximumf %167, %168 : vector<8x256xf32>
    %170 = arith.truncf %169 : vector<8x256xf32> to vector<8x256xbf16>
    %cst_84 = arith.constant 0.000000e+00 : bf16
    %171 = vector.broadcast %cst_84 : bf16 to vector<1x1x256xbf16>
    %c0_85 = arith.constant 0 : index
    %c0_86 = arith.constant 0 : index
    %c0_87 = arith.constant 0 : index
    %172 = vector.load %arg14[%c0_85, %c0_86, %c0_87] : memref<1x10x256xbf16, #tpu.memory_space<vmem>>, vector<1x1x256xbf16>
    tpu.vector_store %arg14[%c0_85, %c0_86, %c0_87], %171 {strides = array<i32>} : memref<1x10x256xbf16, #tpu.memory_space<vmem>>, vector<1x1x256xbf16>,
    %cst_88 = arith.constant 0.000000e+00 : bf16
    %173 = vector.broadcast %cst_88 : bf16 to vector<1x1x256xbf16>
    %c0_89 = arith.constant 0 : index
    %c9_90 = arith.constant 9 : index
    %c0_91 = arith.constant 0 : index
    %174 = vector.load %arg14[%c0_89, %c9_90, %c0_91] : memref<1x10x256xbf16, #tpu.memory_space<vmem>>, vector<1x1x256xbf16>
    tpu.vector_store %arg14[%c0_89, %c9_90, %c0_91], %173 {strides = array<i32>} : memref<1x10x256xbf16, #tpu.memory_space<vmem>>, vector<1x1x256xbf16>,
    %175 = vector.shape_cast %170 : vector<8x256xbf16> to vector<1x8x256xbf16>
    %c0_92 = arith.constant 0 : index
    %c1_93 = arith.constant 1 : index
    %c0_94 = arith.constant 0 : index
    %176 = vector.load %arg14[%c0_92, %c1_93, %c0_94] : memref<1x10x256xbf16, #tpu.memory_space<vmem>>, vector<1x8x256xbf16>
    tpu.vector_store %arg14[%c0_92, %c1_93, %c0_94], %175 {strides = array<i32>} : memref<1x10x256xbf16, #tpu.memory_space<vmem>>, vector<1x8x256xbf16>,
    %c0_95 = arith.constant 0 : index
    %c0_96 = arith.constant 0 : index
    %c0_97 = arith.constant 0 : index
    %177 = vector.load %arg14[%c0_95, %c0_96, %c0_97] : memref<1x10x256xbf16, #tpu.memory_space<vmem>>, vector<1x8x256xbf16>
    %178 = vector.shape_cast %177 : vector<1x8x256xbf16> to vector<8x256xbf16>
    %c0_98 = arith.constant 0 : index
    %c0_99 = arith.constant 0 : index
    %c0_100 = arith.constant 0 : index
    %179 = vector.load %arg10[%c0_98, %c0_99, %c0_100] : memref<3x256x128xbf16, #tpu.memory_space<vmem>>, vector<1x256x128xbf16>
    %180 = vector.shape_cast %179 : vector<1x256x128xbf16> to vector<256x128xbf16>
    %cst_101 = arith.constant dense<0.000000e+00> : vector<8x128xf32>
    %181 = tpu.matmul %178, %180, %cst_101 {dimension_numbers = #tpu.dot_dimension_numbers<[1], [0], [0], [1], [0, 0, 1, 1], [], []>} : vector<8x256xbf16>, vector<256x128xbf16>, vector<8x128xf32> -> vector<8x128xf32>
    %c0_102 = arith.constant 0 : index
    %c1_103 = arith.constant 1 : index
    %c0_104 = arith.constant 0 : index
    %182 = vector.load %arg14[%c0_102, %c1_103, %c0_104] : memref<1x10x256xbf16, #tpu.memory_space<vmem>>, vector<1x8x256xbf16>
    %183 = vector.shape_cast %182 : vector<1x8x256xbf16> to vector<8x256xbf16>
    %c1_105 = arith.constant 1 : index
    %c0_106 = arith.constant 0 : index
    %c0_107 = arith.constant 0 : index
    %184 = vector.load %arg10[%c1_105, %c0_106, %c0_107] : memref<3x256x128xbf16, #tpu.memory_space<vmem>>, vector<1x256x128xbf16>
    %185 = vector.shape_cast %184 : vector<1x256x128xbf16> to vector<256x128xbf16>
    %cst_108 = arith.constant dense<0.000000e+00> : vector<8x128xf32>
    %186 = tpu.matmul %183, %185, %cst_108 {dimension_numbers = #tpu.dot_dimension_numbers<[1], [0], [0], [1], [0, 0, 1, 1], [], []>} : vector<8x256xbf16>, vector<256x128xbf16>, vector<8x128xf32> -> vector<8x128xf32>
    %187 = arith.addf %181, %186 : vector<8x128xf32>
    %c0_109 = arith.constant 0 : index
    %c2_110 = arith.constant 2 : index
    %c0_111 = arith.constant 0 : index
    %188 = vector.load %arg14[%c0_109, %c2_110, %c0_111] : memref<1x10x256xbf16, #tpu.memory_space<vmem>>, vector<1x8x256xbf16>
    %189 = vector.shape_cast %188 : vector<1x8x256xbf16> to vector<8x256xbf16>
    %c2_112 = arith.constant 2 : index
    %c0_113 = arith.constant 0 : index
    %c0_114 = arith.constant 0 : index
    %190 = vector.load %arg10[%c2_112, %c0_113, %c0_114] : memref<3x256x128xbf16, #tpu.memory_space<vmem>>, vector<1x256x128xbf16>
    %191 = vector.shape_cast %190 : vector<1x256x128xbf16> to vector<256x128xbf16>
    %cst_115 = arith.constant dense<0.000000e+00> : vector<8x128xf32>
    %192 = tpu.matmul %189, %191, %cst_115 {dimension_numbers = #tpu.dot_dimension_numbers<[1], [0], [0], [1], [0, 0, 1, 1], [], []>} : vector<8x256xbf16>, vector<256x128xbf16>, vector<8x128xf32> -> vector<8x128xf32>
    %193 = arith.addf %187, %192 : vector<8x128xf32>
    %c0_116 = arith.constant 0 : index
    %c0_117 = arith.constant 0 : index
    %194 = vector.load %arg11[%c0_116, %c0_117] : memref<1x128xf32, #tpu.memory_space<vmem>>, vector<1x128xf32>
    %195 = vector.broadcast %194 : vector<1x128xf32> to vector<8x128xf32>
    %196 = arith.addf %193, %195 : vector<8x128xf32>
    %cst_118 = arith.constant 0.000000e+00 : f32
    %197 = vector.broadcast %cst_118 : f32 to vector<8x128xf32>
    %198 = arith.maximumf %196, %197 : vector<8x128xf32>
    %c0_119 = arith.constant 0 : index
    %c0_120 = arith.constant 0 : index
    %c0_121 = arith.constant 0 : index
    %199 = vector.load %arg12[%c0_119, %c0_120, %c0_121] : memref<1x8x128xf32, #tpu.memory_space<vmem>>, vector<1x8x128xf32>
    %200 = vector.shape_cast %198 : vector<8x128xf32> to vector<1x8x128xf32>
    %201 = arith.addf %199, %200 : vector<1x8x128xf32>
    %c0_122 = arith.constant 0 : index
    %c0_123 = arith.constant 0 : index
    %c0_124 = arith.constant 0 : index
    %202 = vector.load %arg12[%c0_122, %c0_123, %c0_124] : memref<1x8x128xf32, #tpu.memory_space<vmem>>, vector<1x8x128xf32>
    tpu.vector_store %arg12[%c0_122, %c0_123, %c0_124], %201 {strides = array<i32>} : memref<1x8x128xf32, #tpu.memory_space<vmem>>, vector<1x8x128xf32>,
    return
  }
  func.func @transform_0(%arg0: i32) -> (i32, i32, i32) {
    %c0_i32 = arith.constant 0 : i32
    %c0_i32_0 = arith.constant 0 : i32
    %c0_i32_1 = arith.constant 0 : i32
    return %arg0, %c0_i32, %c0_i32_0 : i32, i32, i32
  }
  func.func @transform_1(%arg0: i32) -> (i32, i32) {
    %c0_i32 = arith.constant 0 : i32
    %c0_i32_0 = arith.constant 0 : i32
    %c0_i32_1 = arith.constant 0 : i32
    return %c0_i32, %c0_i32_0 : i32, i32
  }
  func.func @transform_2(%arg0: i32) -> (i32, i32) {
    %c0_i32 = arith.constant 0 : i32
    %c0_i32_0 = arith.constant 0 : i32
    %c0_i32_1 = arith.constant 0 : i32
    return %c0_i32, %c0_i32_0 : i32, i32
  }
  func.func @transform_3(%arg0: i32) -> (i32, i32) {
    %c0_i32 = arith.constant 0 : i32
    %c0_i32_0 = arith.constant 0 : i32
    %c0_i32_1 = arith.constant 0 : i32
    return %c0_i32, %c0_i32_0 : i32, i32
  }
  func.func @transform_4(%arg0: i32) -> (i32, i32) {
    %c0_i32 = arith.constant 0 : i32
    %c0_i32_0 = arith.constant 0 : i32
    %c0_i32_1 = arith.constant 0 : i32
    return %c0_i32, %c0_i32_0 : i32, i32
  }
  func.func @transform_5(%arg0: i32) -> (i32, i32) {
    %c0_i32 = arith.constant 0 : i32
    %c0_i32_0 = arith.constant 0 : i32
    %c0_i32_1 = arith.constant 0 : i32
    return %c0_i32, %c0_i32_0 : i32, i32
  }
  func.func @transform_6(%arg0: i32) -> (i32, i32) {
    %c0_i32 = arith.constant 0 : i32
    %c0_i32_0 = arith.constant 0 : i32
    %c0_i32_1 = arith.constant 0 : i32
    return %c0_i32, %c0_i32_0 : i32, i32
  }
  func.func @transform_7(%arg0: i32) -> (i32, i32, i32) {
    %c0_i32 = arith.constant 0 : i32
    %c0_i32_0 = arith.constant 0 : i32
    %c0_i32_1 = arith.constant 0 : i32
    %c0_i32_2 = arith.constant 0 : i32
    return %c0_i32, %c0_i32_0, %c0_i32_1 : i32, i32, i32
  }
  func.func @transform_8(%arg0: i32) -> (i32, i32) {
    %c0_i32 = arith.constant 0 : i32
    %c0_i32_0 = arith.constant 0 : i32
    %c0_i32_1 = arith.constant 0 : i32
    return %c0_i32, %c0_i32_0 : i32, i32
  }
  func.func @transform_9(%arg0: i32) -> (i32, i32, i32) {
    %c0_i32 = arith.constant 0 : i32
    %c0_i32_0 = arith.constant 0 : i32
    %c0_i32_1 = arith.constant 0 : i32
    %c0_i32_2 = arith.constant 0 : i32
    return %c0_i32, %c0_i32_0, %c0_i32_1 : i32, i32, i32
  }
  func.func @transform_10(%arg0: i32) -> (i32, i32) {
    %c0_i32 = arith.constant 0 : i32
    %c0_i32_0 = arith.constant 0 : i32
    %c0_i32_1 = arith.constant 0 : i32
    return %c0_i32, %c0_i32_0 : i32, i32
  }
  func.func @transform_11(%arg0: i32) -> (i32, i32, i32) {
    %c0_i32 = arith.constant 0 : i32
    %c0_i32_0 = arith.constant 0 : i32
    %c0_i32_1 = arith.constant 0 : i32
    return %arg0, %c0_i32, %c0_i32_0 : i32, i32, i32
  }
}

</mosaic_0001>

<llo_original>
// kernel: tpu_custom_call.1
$region0: #{tpu_custom_call.1}
  #allocation0 [shape = 'u32[]', space=smem, size = 0x4, offset = 0x4, fixed_abs, tag = 'smem constant byte address 0x4 - core index']
  #allocation1 [shape = 'u32[144,128]{1,0:T(1,128)}', space=vmem, size = 0x12000, scoped, tag = 'internal scratch']
  #allocation2 [shape = 'bf16[1,10,128]{2,1,0:T(8,128)(2,1)}', space=vmem, size = 0x1000, scoped, tag = 'scratch operand']
  #allocation3 [shape = 'bf16[1,10,256]{2,1,0:T(8,128)(2,1)}', space=vmem, size = 0x2000, scoped, tag = 'scratch operand']
  %s0 = inlined_call_operand.hbm [shape: f32[2,8,128], index: 0, kind: input, shape index: {}]
  %s1 = inlined_call_operand.vmem [shape: f32[1,128], index: 1, kind: input, shape index: {}]
  %s2 = inlined_call_operand.hbm [shape: f32[1,128], index: 2, kind: input, shape index: {}]
  %s3 = inlined_call_operand.hbm [shape: bf16[128,384], index: 3, kind: input, shape index: {}]
  %s4 = inlined_call_operand.hbm [shape: bf16[128,128], index: 4, kind: input, shape index: {}]
  %s5 = inlined_call_operand.vmem [shape: f32[1,128], index: 5, kind: input, shape index: {}]
  %s6 = inlined_call_operand.vmem [shape: f32[1,128], index: 6, kind: input, shape index: {}]
  %s7 = inlined_call_operand.hbm [shape: bf16[3,128,256], index: 7, kind: input, shape index: {}]
  %s8 = inlined_call_operand.vmem [shape: f32[1,256], index: 8, kind: input, shape index: {}]
  %s9 = inlined_call_operand.hbm [shape: bf16[3,256,128], index: 9, kind: input, shape index: {}]
  %s10 = inlined_call_operand.vmem [shape: f32[1,128], index: 10, kind: input, shape index: {}]
  %s11 = inlined_call_operand.hbm [shape: f32[2,8,128], index: 11, kind: output, shape index: {}]
  %s12 = sld [smem:[#allocation0]]
  $region101: #{tpu_custom_call.1} parent=0
    _
  %s14 = ssub.s32 1, %s12
  %s15 = scalar_select 0, %s14, %s12
  $region1: #{tpu_custom_call.1} parent=0
    #allocation4 [shape = 'u8[8192]{0}', space=vmem, size = 0x2000, scoped, tag = 'input window, operand 0']
    #allocation5 [shape = 's32[2]{0}', space=sflag, size = 0x8, scoped, tag = 'scoped memory for tpu_custom_call.1']
    #allocation6 [shape = 's32[2]{0}', space=sflag, size = 0x8, scoped, tag = 'scoped memory for tpu_custom_call.1']
    #allocation7 [shape = 'u8[512]{0}', space=vmem, size = 0x400, scoped, tag = 'input window, operand 2, single buffered']
    #allocation8 [shape = 's32[1]{0}', space=sflag, size = 0x4, scoped, tag = 'scoped memory for tpu_custom_call.1']
    #allocation9 [shape = 'u8[98304]{0}', space=vmem, size = 0x18000, scoped, tag = 'input window, operand 3, single buffered']
    #allocation10 [shape = 'u8[32768]{0}', space=vmem, size = 0x8000, scoped, tag = 'input window, operand 4, single buffered']
    #allocation11 [shape = 's32[1]{0}', space=sflag, size = 0x4, scoped, tag = 'scoped memory for tpu_custom_call.1']
    #allocation12 [shape = 'u8[196608]{0}', space=vmem, size = 0x30000, scoped, tag = 'input window, operand 7, single buffered']
    #allocation13 [shape = 'u8[196608]{0}', space=vmem, size = 0x30000, scoped, tag = 'input window, operand 9, single buffered']
    #allocation14 [shape = 's32[1]{0}', space=sflag, size = 0x4, scoped, tag = 'scoped memory for tpu_custom_call.1']
    #allocation15 [shape = 'u8[8192]{0}', space=vmem, size = 0x2000, scoped, tag = 'output window, operand 0']
    %16 = vsyncpa [#allocation5], 0
    %s17 = scalar_lea.sflag [#allocation5], 1
    %18 = vsyncpa %s17, 0
    %19 = vsyncpa [#allocation8], 0
    %20 = vsyncpa [#allocation11], 0
    %21 = vsyncpa [#allocation14], 0
    %22 = vsyncpa [#allocation6], 0
    %s23 = scalar_lea.sflag [#allocation6], 1
    %24 = vsyncpa %s23, 0
    loop: start=0, step=1, limit=4
    $region2: #{tpu_custom_call.1} parent=1 // loop_pre_header
      _
    $region3: #{tpu_custom_call.1} parent=1 // loop_header
      %s26 = sphi 0, %s30
      %p27 = scmp.ge.s32.totalorder %s26, 4
      %s36 = sphi 0, %s38
      %s39 = sphi 0, %s36
      %s40 = sphi 0, %s39
      %s56 = sphi 0, %s40
      %s60 = sphi 0, %s60
      %s62 = sphi 0, %s60
      %s63 = sphi 0, %s62
      %s77 = sphi 0, %s63
      %s81 = sphi 0, %s81
      %s83 = sphi 0, %s81
      %s84 = sphi 0, %s83
      %s98 = sphi 0, %s84
      %s102 = sphi 0, %s102
      %s104 = sphi 0, %s102
      %s105 = sphi 0, %s104
      %s119 = sphi 0, %s105
      %s123 = sphi 0, %s123
      %s125 = sphi 0, %s123
      %s126 = sphi 0, %s125
      %s140 = sphi 0, %s126
      %s144 = sphi 0, %s144
      %s146 = sphi 0, %s144
      %s147 = sphi 0, %s146
      %s161 = sphi 0, %s147
      %s165 = sphi 0, %s165
      %s167 = sphi 0, %s165
      %s168 = sphi 0, %s167
      %s182 = sphi 0, %s168
      %s186 = sphi 0, %s186
      %s188 = sphi 0, %s186
      %s189 = sphi 0, %s188
      %s203 = sphi 0, %s189
      %s207 = sphi 0, %s207
      %s209 = sphi 0, %s207
      %s210 = sphi 0, %s209
      %s224 = sphi 0, %s210
      %s228 = sphi 0, %s228
      %s230 = sphi 0, %s228
      %s231 = sphi 0, %s230
      %s245 = sphi 0, %s231
      %s249 = sphi 0, %s249
      %s251 = sphi 0, %s249
      %s252 = sphi 0, %s251
      %s266 = sphi 0, %s252
      %s272 = sphi 0, %s274
      %s275 = sphi 0, %s272
      %s276 = sphi 0, %s275
      %s292 = sphi 0, %s276
    $region4: #{tpu_custom_call.1} parent=1 // loop_header_branch
      %29 = sbr.rel (%p27) target = $region8
    $region5: #{tpu_custom_call.1} parent=1 // loop_body
      %s31 = ssub.s32 %s26, 1
      %s32 = ssub.s32 %s26, 2
      %s33 = sadd.s32 %s26, 1
      %s34 = ssub.s32 %s26, %s33
      %p35 = scmp.eq.s32.totalorder %s34, 0
      %s37 = sadd.s32 %s36, 1
      %s38 = scalar_select %p35, %s36, %s37
      %p41 = pneg %p35
      %p42 = scmp.eq.s32.totalorder %s26, 1
      %p43 = por %p41, %p42
      %p44 = scmp.ne.s32.totalorder %s36, %s39
      %p45 = scmp.eq.s32.totalorder %s26, 0
      %p46 = por %p44, %p45
      %p47 = scmp.ne.s32.totalorder %s36, %s39
      %p48 = scmp.eq.s32.totalorder %s31, 1
      %p49 = por %p47, %p48
      %p50 = scmp.ne.s32.totalorder %s39, %s40
      %p51 = scmp.eq.s32.totalorder %s31, 0
      %p52 = por %p50, %p51
      %p53 = scmp.ne.s32.totalorder %s39, %s40
      %p54 = scmp.eq.s32.totalorder %s32, 1
      %p55 = por %p53, %p54
      %p57 = scmp.ne.s32.totalorder %s40, %s56
      %p58 = scmp.eq.s32.totalorder %s32, 0
      %p59 = por %p57, %p58
      %s61 = sadd.s32 %s60, 1
      %p64 = scmp.eq.s32.totalorder %s26, 1
      %p65 = scmp.ne.s32.totalorder %s60, %s62
      %p66 = scmp.eq.s32.totalorder %s26, 0
      %p67 = por %p65, %p66
      %p68 = scmp.ne.s32.totalorder %s60, %s62
      %p69 = scmp.eq.s32.totalorder %s31, 1
      %p70 = por %p68, %p69
      %p71 = scmp.ne.s32.totalorder %s62, %s63
      %p72 = scmp.eq.s32.totalorder %s31, 0
      %p73 = por %p71, %p72
      %p74 = scmp.ne.s32.totalorder %s62, %s63
      %p75 = scmp.eq.s32.totalorder %s32, 1
      %p76 = por %p74, %p75
      %p78 = scmp.ne.s32.totalorder %s63, %s77
      %p79 = scmp.eq.s32.totalorder %s32, 0
      %p80 = por %p78, %p79
      %s82 = sadd.s32 %s81, 1
      %p85 = scmp.eq.s32.totalorder %s26, 1
      %p86 = scmp.ne.s32.totalorder %s81, %s83
      %p87 = scmp.eq.s32.totalorder %s26, 0
      %p88 = por %p86, %p87
      %p89 = scmp.ne.s32.totalorder %s81, %s83
      %p90 = scmp.eq.s32.totalorder %s31, 1
      %p91 = por %p89, %p90
      %p92 = scmp.ne.s32.totalorder %s83, %s84
      %p93 = scmp.eq.s32.totalorder %s31, 0
      %p94 = por %p92, %p93
      %p95 = scmp.ne.s32.totalorder %s83, %s84
      %p96 = scmp.eq.s32.totalorder %s32, 1
      %p97 = por %p95, %p96
      %p99 = scmp.ne.s32.totalorder %s84, %s98
      %p100 = scmp.eq.s32.totalorder %s32, 0
      %p101 = por %p99, %p100
      %s103 = sadd.s32 %s102, 1
      %p106 = scmp.eq.s32.totalorder %s26, 1
      %p107 = scmp.ne.s32.totalorder %s102, %s104
      %p108 = scmp.eq.s32.totalorder %s26, 0
      %p109 = por %p107, %p108
      %p110 = scmp.ne.s32.totalorder %s102, %s104
      %p111 = scmp.eq.s32.totalorder %s31, 1
      %p112 = por %p110, %p111
      %p113 = scmp.ne.s32.totalorder %s104, %s105
      %p114 = scmp.eq.s32.totalorder %s31, 0
      %p115 = por %p113, %p114
      %p116 = scmp.ne.s32.totalorder %s104, %s105
      %p117 = scmp.eq.s32.totalorder %s32, 1
      %p118 = por %p116, %p117
      %p120 = scmp.ne.s32.totalorder %s105, %s119
      %p121 = scmp.eq.s32.totalorder %s32, 0
      %p122 = por %p120, %p121
      %s124 = sadd.s32 %s123, 1
      %p127 = scmp.eq.s32.totalorder %s26, 1
      %p128 = scmp.ne.s32.totalorder %s123, %s125
      %p129 = scmp.eq.s32.totalorder %s26, 0
      %p130 = por %p128, %p129
      %p131 = scmp.ne.s32.totalorder %s123, %s125
      %p132 = scmp.eq.s32.totalorder %s31, 1
      %p133 = por %p131, %p132
      %p134 = scmp.ne.s32.totalorder %s125, %s126
      %p135 = scmp.eq.s32.totalorder %s31, 0
      %p136 = por %p134, %p135
      %p137 = scmp.ne.s32.totalorder %s125, %s126
      %p138 = scmp.eq.s32.totalorder %s32, 1
      %p139 = por %p137, %p138
      %p141 = scmp.ne.s32.totalorder %s126, %s140
      %p142 = scmp.eq.s32.totalorder %s32, 0
      %p143 = por %p141, %p142
      %s145 = sadd.s32 %s144, 1
      %p148 = scmp.eq.s32.totalorder %s26, 1
      %p149 = scmp.ne.s32.totalorder %s144, %s146
      %p150 = scmp.eq.s32.totalorder %s26, 0
      %p151 = por %p149, %p150
      %p152 = scmp.ne.s32.totalorder %s144, %s146
      %p153 = scmp.eq.s32.totalorder %s31, 1
      %p154 = por %p152, %p153
      %p155 = scmp.ne.s32.totalorder %s146, %s147
      %p156 = scmp.eq.s32.totalorder %s31, 0
      %p157 = por %p155, %p156
      %p158 = scmp.ne.s32.totalorder %s146, %s147
      %p159 = scmp.eq.s32.totalorder %s32, 1
      %p160 = por %p158, %p159
      %p162 = scmp.ne.s32.totalorder %s147, %s161
      %p163 = scmp.eq.s32.totalorder %s32, 0
      %p164 = por %p162, %p163
      %s166 = sadd.s32 %s165, 1
      %p169 = scmp.eq.s32.totalorder %s26, 1
      %p170 = scmp.ne.s32.totalorder %s165, %s167
      %p171 = scmp.eq.s32.totalorder %s26, 0
      %p172 = por %p170, %p171
      %p173 = scmp.ne.s32.totalorder %s165, %s167
      %p174 = scmp.eq.s32.totalorder %s31, 1
      %p175 = por %p173, %p174
      %p176 = scmp.ne.s32.totalorder %s167, %s168
      %p177 = scmp.eq.s32.totalorder %s31, 0
      %p178 = por %p176, %p177
      %p179 = scmp.ne.s32.totalorder %s167, %s168
      %p180 = scmp.eq.s32.totalorder %s32, 1
      %p181 = por %p179, %p180
      %p183 = scmp.ne.s32.totalorder %s168, %s182
      %p184 = scmp.eq.s32.totalorder %s32, 0
      %p185 = por %p183, %p184
      %s187 = sadd.s32 %s186, 1
      %p190 = scmp.eq.s32.totalorder %s26, 1
      %p191 = scmp.ne.s32.totalorder %s186, %s188
      %p192 = scmp.eq.s32.totalorder %s26, 0
      %p193 = por %p191, %p192
      %p194 = scmp.ne.s32.totalorder %s186, %s188
      %p195 = scmp.eq.s32.totalorder %s31, 1
      %p196 = por %p194, %p195
      %p197 = scmp.ne.s32.totalorder %s188, %s189
      %p198 = scmp.eq.s32.totalorder %s31, 0
      %p199 = por %p197, %p198
      %p200 = scmp.ne.s32.totalorder %s188, %s189
      %p201 = scmp.eq.s32.totalorder %s32, 1
      %p202 = por %p200, %p201
      %p204 = scmp.ne.s32.totalorder %s189, %s203
      %p205 = scmp.eq.s32.totalorder %s32, 0
      %p206 = por %p204, %p205
      %s208 = sadd.s32 %s207, 1
      %p211 = scmp.eq.s32.totalorder %s26, 1
      %p212 = scmp.ne.s32.totalorder %s207, %s209
      %p213 = scmp.eq.s32.totalorder %s26, 0
      %p214 = por %p212, %p213
      %p215 = scmp.ne.s32.totalorder %s207, %s209
      %p216 = scmp.eq.s32.totalorder %s31, 1
      %p217 = por %p215, %p216
      %p218 = scmp.ne.s32.totalorder %s209, %s210
      %p219 = scmp.eq.s32.totalorder %s31, 0
      %p220 = por %p218, %p219
      %p221 = scmp.ne.s32.totalorder %s209, %s210
      %p222 = scmp.eq.s32.totalorder %s32, 1
      %p223 = por %p221, %p222
      %p225 = scmp.ne.s32.totalorder %s210, %s224
      %p226 = scmp.eq.s32.totalorder %s32, 0
      %p227 = por %p225, %p226
      %s229 = sadd.s32 %s228, 1
      %p232 = scmp.eq.s32.totalorder %s26, 1
      %p233 = scmp.ne.s32.totalorder %s228, %s230
      %p234 = scmp.eq.s32.totalorder %s26, 0
      %p235 = por %p233, %p234
      %p236 = scmp.ne.s32.totalorder %s228, %s230
      %p237 = scmp.eq.s32.totalorder %s31, 1
      %p238 = por %p236, %p237
      %p239 = scmp.ne.s32.totalorder %s230, %s231
      %p240 = scmp.eq.s32.totalorder %s31, 0
      %p241 = por %p239, %p240
      %p242 = scmp.ne.s32.totalorder %s230, %s231
      %p243 = scmp.eq.s32.totalorder %s32, 1
      %p244 = por %p242, %p243
      %p246 = scmp.ne.s32.totalorder %s231, %s245
      %p247 = scmp.eq.s32.totalorder %s32, 0
      %p248 = por %p246, %p247
      %s250 = sadd.s32 %s249, 1
      %p253 = scmp.eq.s32.totalorder %s26, 1
      %p254 = scmp.ne.s32.totalorder %s249, %s251
      %p255 = scmp.eq.s32.totalorder %s26, 0
      %p256 = por %p254, %p255
      %p257 = scmp.ne.s32.totalorder %s249, %s251
      %p258 = scmp.eq.s32.totalorder %s31, 1
      %p259 = por %p257, %p258
      %p260 = scmp.ne.s32.totalorder %s251, %s252
      %p261 = scmp.eq.s32.totalorder %s31, 0
      %p262 = por %p260, %p261
      %p263 = scmp.ne.s32.totalorder %s251, %s252
      %p264 = scmp.eq.s32.totalorder %s32, 1
      %p265 = por %p263, %p264
      %p267 = scmp.ne.s32.totalorder %s252, %s266
      %p268 = scmp.eq.s32.totalorder %s32, 0
      %p269 = por %p267, %p268
      %s270 = ssub.s32 %s26, %s33
      %p271 = scmp.eq.s32.totalorder %s270, 0
      %s273 = sadd.s32 %s272, 1
      %s274 = scalar_select %p271, %s272, %s273
      %p277 = pneg %p271
      %p278 = scmp.eq.s32.totalorder %s26, 1
      %p279 = por %p277, %p278
      %p280 = scmp.ne.s32.totalorder %s272, %s275
      %p281 = scmp.eq.s32.totalorder %s26, 0
      %p282 = por %p280, %p281
      %p283 = scmp.ne.s32.totalorder %s272, %s275
      %p284 = scmp.eq.s32.totalorder %s31, 1
      %p285 = por %p283, %p284
      %p286 = scmp.ne.s32.totalorder %s275, %s276
      %p287 = scmp.eq.s32.totalorder %s31, 0
      %p288 = por %p286, %p287
      %p289 = scmp.ne.s32.totalorder %s275, %s276
      %p290 = scmp.eq.s32.totalorder %s32, 1
      %p291 = por %p289, %p290
      %p293 = scmp.ne.s32.totalorder %s276, %s292
      %p294 = scmp.eq.s32.totalorder %s32, 0
      %p295 = por %p293, %p294
      %p296 = scmp.le.s32.totalorder 1, %s26
      %p297 = scmp.lt.s32.totalorder %s26, 3
      %p298 = pnand %p296, %p297
      %p299 = pneg %p298
      // Predicated region
      $region9: #{tpu_custom_call.1} parent=5 // pred_check
        _
      $region10: #{tpu_custom_call.1} parent=5 // pred_check_branch
        %301 = sbr.rel (%p298) target = $region12
      $region11: #{tpu_custom_call.1} parent=5 // pred_region
        %s302 = ssub.s32 %s26, 1
        // Predicated region
        $region13: #{tpu_custom_call.1} parent=11 // pred_check
          %p303 = pneg %p73
        $region14: #{tpu_custom_call.1} parent=11 // pred_check_branch
          %305 = sbr.rel (%p303) target = $region16
        $region15: #{tpu_custom_call.1} parent=11 // pred_region
          _
        $region16: #{tpu_custom_call.1} parent=11 // pred_fallthru
          _
        // Predicated region
        $region17: #{tpu_custom_call.1} parent=11 // pred_check
          %p306 = pneg %p94
        $region18: #{tpu_custom_call.1} parent=11 // pred_check_branch
          %308 = sbr.rel (%p306) target = $region20
        $region19: #{tpu_custom_call.1} parent=11 // pred_region
          %s310 = ssub.s32 16, 16
          %311 = vsyncadd [#allocation8], %s310
          %s313 = sshll.u32 [#allocation7], 4
          %s314 = int_to_ptr.vmem [resolvable:$true] %s313
          %316 = dma.hbm_to_vmem [thread:$0]  %s2, 16, %s314, [#allocation8]
        $region20: #{tpu_custom_call.1} parent=11 // pred_fallthru
          _
        // Predicated region
        $region21: #{tpu_custom_call.1} parent=11 // pred_check
          %p317 = pneg %p115
        $region22: #{tpu_custom_call.1} parent=11 // pred_check_branch
          %319 = sbr.rel (%p317) target = $region24
        $region23: #{tpu_custom_call.1} parent=11 // pred_region
          %s321 = ssub.s32 3072, 3072
          %322 = vsyncadd [#allocation8], %s321
          %s323 = sshll.u32 [#allocation9], 4
          %s324 = int_to_ptr.vmem [resolvable:$true] %s323
          %329 = dma.hbm_to_vmem [thread:$0]  %s3, 3072, %s324, [#allocation8], 192, 192, 12
        $region24: #{tpu_custom_call.1} parent=11 // pred_fallthru
          _
        // Predicated region
        $region25: #{tpu_custom_call.1} parent=11 // pred_check
          %p330 = pneg %p136
        $region26: #{tpu_custom_call.1} parent=11 // pred_check_branch
          %332 = sbr.rel (%p330) target = $region28
        $region27: #{tpu_custom_call.1} parent=11 // pred_region
          %s334 = ssub.s32 1024, 1024
          %335 = vsyncadd [#allocation11], %s334
          %s336 = sshll.u32 [#allocation10], 4
          %s337 = int_to_ptr.vmem [resolvable:$true] %s336
          %342 = dma.hbm_to_vmem [thread:$0]  %s4, 1024, %s337, [#allocation11], 64, 64, 4
        $region28: #{tpu_custom_call.1} parent=11 // pred_fallthru
          _
        // Predicated region
        $region29: #{tpu_custom_call.1} parent=11 // pred_check
          %p343 = pneg %p157
        $region30: #{tpu_custom_call.1} parent=11 // pred_check_branch
          %345 = sbr.rel (%p343) target = $region32
        $region31: #{tpu_custom_call.1} parent=11 // pred_region
          _
        $region32: #{tpu_custom_call.1} parent=11 // pred_fallthru
          _
        // Predicated region
        $region33: #{tpu_custom_call.1} parent=11 // pred_check
          %p346 = pneg %p178
        $region34: #{tpu_custom_call.1} parent=11 // pred_check_branch
          %348 = sbr.rel (%p346) target = $region36
        $region35: #{tpu_custom_call.1} parent=11 // pred_region
          _
        $region36: #{tpu_custom_call.1} parent=11 // pred_fallthru
          _
        // Predicated region
        $region37: #{tpu_custom_call.1} parent=11 // pred_check
          %p349 = pneg %p199
        $region38: #{tpu_custom_call.1} parent=11 // pred_check_branch
          %351 = sbr.rel (%p349) target = $region40
        $region39: #{tpu_custom_call.1} parent=11 // pred_region
          %s353 = ssub.s32 6144, 6144
          %354 = vsyncadd [#allocation11], %s353
          %s355 = sshll.u32 [#allocation12], 4
          %s356 = int_to_ptr.vmem [resolvable:$true] %s355
          %361 = dma.hbm_to_vmem [thread:$0]  %s7, 6144, %s356, [#allocation11], 128, 128, 8
        $region40: #{tpu_custom_call.1} parent=11 // pred_fallthru
          _
        // Predicated region
        $region41: #{tpu_custom_call.1} parent=11 // pred_check
          %p362 = pneg %p220
        $region42: #{tpu_custom_call.1} parent=11 // pred_check_branch
          %364 = sbr.rel (%p362) target = $region44
        $region43: #{tpu_custom_call.1} parent=11 // pred_region
          _
        $region44: #{tpu_custom_call.1} parent=11 // pred_fallthru
          _
        // Predicated region
        $region45: #{tpu_custom_call.1} parent=11 // pred_check
          %p365 = pneg %p241
        $region46: #{tpu_custom_call.1} parent=11 // pred_check_branch
          %367 = sbr.rel (%p365) target = $region48
        $region47: #{tpu_custom_call.1} parent=11 // pred_region
          %s369 = ssub.s32 6144, 6144
          %370 = vsyncadd [#allocation14], %s369
          %s371 = sshll.u32 [#allocation13], 4
          %s372 = int_to_ptr.vmem [resolvable:$true] %s371
          %377 = dma.hbm_to_vmem [thread:$0]  %s9, 6144, %s372, [#allocation14], 64, 64, 4
        $region48: #{tpu_custom_call.1} parent=11 // pred_fallthru
          _
        // Predicated region
        $region49: #{tpu_custom_call.1} parent=11 // pred_check
          %p378 = pneg %p262
        $region50: #{tpu_custom_call.1} parent=11 // pred_check_branch
          %380 = sbr.rel (%p378) target = $region52
        $region51: #{tpu_custom_call.1} parent=11 // pred_region
          _
        $region52: #{tpu_custom_call.1} parent=11 // pred_fallthru
          _
      $region12: #{tpu_custom_call.1} parent=5 // pred_fallthru
        _
      %p381 = scmp.lt.s32.totalorder %s26, 2
      // Predicated region
      $region53: #{tpu_custom_call.1} parent=5 // pred_check
        %p382 = pneg %p381
      $region54: #{tpu_custom_call.1} parent=5 // pred_check_branch
        %384 = sbr.rel (%p382) target = $region56
      $region55: #{tpu_custom_call.1} parent=5 // pred_region
        // Predicated region
        $region57: #{tpu_custom_call.1} parent=55 // pred_check
          %p385 = pneg %p46
        $region58: #{tpu_custom_call.1} parent=55 // pred_check_branch
          %387 = sbr.rel (%p385) target = $region60
        $region59: #{tpu_custom_call.1} parent=55 // pred_region
          %s388 = sand.u32 %s36, 1
          %s389 = scalar_lea.sflag [#allocation5], %s388
          %s390 = sand.u32 %s36, 1
          %s391 = smul.addr %s390, 8
          %s392 = scalar_lea.vmem [#allocation4], %s391
          %s394 = ssub.s32 128, 128
          %395 = vsyncadd %s389, %s394
          %s396 = smul.addr %s26, 128
          %s397 = scalar_lea.hbm %s0, %s396
          %s399 = sshll.u32 %s392, 4
          %s400 = int_to_ptr.vmem [resolvable:$true] %s399
          %402 = dma.hbm_to_vmem [thread:$0]  %s397, 128, %s400, %s389
        $region60: #{tpu_custom_call.1} parent=55 // pred_fallthru
          _
      $region56: #{tpu_custom_call.1} parent=5 // pred_fallthru
        _
      %p403 = scmp.le.s32.totalorder 1, %s26
      %p404 = scmp.lt.s32.totalorder %s26, 3
      %p405 = pnand %p403, %p404
      %p406 = pneg %p405
      // Predicated region
      $region61: #{tpu_custom_call.1} parent=5 // pred_check
        _
      $region62: #{tpu_custom_call.1} parent=5 // pred_check_branch
        %408 = sbr.rel (%p405) target = $region64
      $region63: #{tpu_custom_call.1} parent=5 // pred_region
        %s409 = ssub.s32 %s26, 1
        %s410 = sand.u32 %s39, 1
        %s411 = scalar_lea.sflag [#allocation5], %s410
        %s412 = sand.u32 %s39, 1
        %s413 = smul.addr %s412, 8
        %s414 = scalar_lea.vmem [#allocation4], %s413
        // Predicated region
        $region65: #{tpu_custom_call.1} parent=63 // pred_check
          %p415 = pneg %p52
        $region66: #{tpu_custom_call.1} parent=63 // pred_check_branch
          %417 = sbr.rel (%p415) target = $region68
        $region67: #{tpu_custom_call.1} parent=63 // pred_region
          %418 = dma.done %s411, 128
        $region68: #{tpu_custom_call.1} parent=63 // pred_fallthru
          _
        // Predicated region
        $region69: #{tpu_custom_call.1} parent=63 // pred_check
          %p419 = pneg %p94
        $region70: #{tpu_custom_call.1} parent=63 // pred_check_branch
          %421 = sbr.rel (%p419) target = $region72
        $region71: #{tpu_custom_call.1} parent=63 // pred_region
          %422 = dma.done [#allocation8], 16
        $region72: #{tpu_custom_call.1} parent=63 // pred_fallthru
          _
        // Predicated region
        $region73: #{tpu_custom_call.1} parent=63 // pred_check
          %p423 = pneg %p115
        $region74: #{tpu_custom_call.1} parent=63 // pred_check_branch
          %425 = sbr.rel (%p423) target = $region76
        $region75: #{tpu_custom_call.1} parent=63 // pred_region
          %426 = dma.done [#allocation8], 3072
        $region76: #{tpu_custom_call.1} parent=63 // pred_fallthru
          _
        // Predicated region
        $region77: #{tpu_custom_call.1} parent=63 // pred_check
          %p427 = pneg %p136
        $region78: #{tpu_custom_call.1} parent=63 // pred_check_branch
          %429 = sbr.rel (%p427) target = $region80
        $region79: #{tpu_custom_call.1} parent=63 // pred_region
          %430 = dma.done [#allocation11], 1024
        $region80: #{tpu_custom_call.1} parent=63 // pred_fallthru
          _
        // Predicated region
        $region81: #{tpu_custom_call.1} parent=63 // pred_check
          %p431 = pneg %p199
        $region82: #{tpu_custom_call.1} parent=63 // pred_check_branch
          %433 = sbr.rel (%p431) target = $region84
        $region83: #{tpu_custom_call.1} parent=63 // pred_region
          %434 = dma.done [#allocation11], 6144
        $region84: #{tpu_custom_call.1} parent=63 // pred_fallthru
          _
        // Predicated region
        $region85: #{tpu_custom_call.1} parent=63 // pred_check
          %p435 = pneg %p241
        $region86: #{tpu_custom_call.1} parent=63 // pred_check_branch
          %437 = sbr.rel (%p435) target = $region88
        $region87: #{tpu_custom_call.1} parent=63 // pred_region
          %438 = dma.done [#allocation14], 6144
        $region88: #{tpu_custom_call.1} parent=63 // pred_fallthru
          _
        %s439 = sand.u32 %s39, 1
        %s440 = scalar_lea.sflag [#allocation5], %s439
        %s441 = sand.u32 %s39, 1
        %s442 = smul.addr %s441, 8
        %s443 = scalar_lea.vmem [#allocation4], %s442
        %p444 = pneg %p52
        %p445 = pneg %p49
        %p446 = pneg %p73
        %p447 = pneg %p70
        %p448 = pneg %p94
        %p449 = pneg %p91
        %p450 = pneg %p115
        %p451 = pneg %p112
        %p452 = pneg %p136
        %p453 = pneg %p133
        %p454 = pneg %p157
        %p455 = pneg %p154
        %p456 = pneg %p178
        %p457 = pneg %p175
        %p458 = pneg %p199
        %p459 = pneg %p196
        %p460 = pneg %p220
        %p461 = pneg %p217
        %p462 = pneg %p241
        %p463 = pneg %p238
        %p464 = pneg %p262
        %p465 = pneg %p259
        %p466 = pneg %p288
        %p467 = pneg %p285
        %s468 = sand.u32 %s275, 1
        %s469 = scalar_lea.sflag [#allocation6], %s468
        %s470 = sand.u32 %s275, 1
        %s471 = smul.addr %s470, 8
        %s472 = scalar_lea.vmem [#allocation15], %s471
        %v474 = vld [vmem:[%s414] sm:$0xff]
        %v475 = vld [vmem:[%s1] sm:$0x1]
        %v476 = vld [vmem:[#allocation7] sm:$0x1]
        %477 = vadd.xlane.f32.xlu0 %v474
        %v478 = vpop.xlane.xlu0 %477
        %v479 = vrcp.pop 128.0
        %v480 = vmul.f32 %v478, %v479
        %v481 = vsub.f32 %v474, %v480
        %v482 = vmul.f32 %v481, %v481
        %483 = vadd.xlane.f32.xlu0 %v482
        %v484 = vpop.xlane.xlu0 %483
        %v485 = vrcp.pop 127.0
        %v486 = vmul.f32 %v484, %v485
        %v487 = vrsqrt.pop %v486
        %v488 = vmul.f32 %v486, %v487
        %vm489 = vcmp.eq.f32.partialorder %v486, inf
        %v490 = vsel %vm489, %v486, %v488
        %vm491 = vcmp.eq.f32.partialorder %v486, 0.0
        %v492 = vand.u32 %v486, 2147483648
        %v493 = vsel %vm491, %v492, %v490
        %v494 = vadd.f32 %v493, 1e-06
        %v495 = vrcp.pop %v494
        %v496 = vmul.f32 1.0, %v495
        %v497 = vmul.f32 %v481, %v496
        %v499 = vlaneseq
        %v500 = vshrl.u32 %v499, 7
        %v501 = vsub.s32 0, %v500
        %v502 = vrot.slane %v475, %v501
        %v504 = vmul.f32 %v502, %v497
        %v506 = vlaneseq
        %v507 = vshrl.u32 %v506, 7
        %v508 = vsub.s32 0, %v507
        %v509 = vrot.slane %v476, %v508
        %v511 = vadd.f32 %v504, %v509
        %v512 = vpack.c.bf16 %v511, %v511
        %v513 = vld [vmem:[#allocation9] sm:$0xff]
        %v514 = vld [vmem:[#allocation9 + $0x8] sm:$0xf]
        %v515 = vld [vmem:[#allocation9 + $0xc] sm:$0xff]
        %v516 = vld [vmem:[#allocation9 + $0x14] sm:$0xf]
        %v517 = vld [vmem:[#allocation9 + $0x18] sm:$0xff]
        %v518 = vld [vmem:[#allocation9 + $0x20] sm:$0xf]
        %v519 = vld [vmem:[#allocation9 + $0x24] sm:$0xff]
        %v520 = vld [vmem:[#allocation9 + $0x2c] sm:$0xf]
        %v521 = vld [vmem:[#allocation9 + $0x30] sm:$0xff]
        %v522 = vld [vmem:[#allocation9 + $0x38] sm:$0xf]
        %v523 = vld [vmem:[#allocation9 + $0x3c] sm:$0xff]
        %v524 = vld [vmem:[#allocation9 + $0x44] sm:$0xf]
        %v525 = vld [vmem:[#allocation9 + $0x48] sm:$0xff]
        %v526 = vld [vmem:[#allocation9 + $0x50] sm:$0xf]
        %v527 = vld [vmem:[#allocation9 + $0x54] sm:$0xff]
        %v528 = vld [vmem:[#allocation9 + $0x5c] sm:$0xf]
        %v529 = vld [vmem:[#allocation9 + $0x60] sm:$0xff]
        %v530 = vld [vmem:[#allocation9 + $0x68] sm:$0xf]
        %v531 = vld [vmem:[#allocation9 + $0x6c] sm:$0xff]
        %v532 = vld [vmem:[#allocation9 + $0x74] sm:$0xf]
        %v533 = vld [vmem:[#allocation9 + $0x78] sm:$0xff]
        %v534 = vld [vmem:[#allocation9 + $0x80] sm:$0xf]
        %v535 = vld [vmem:[#allocation9 + $0x84] sm:$0xff]
        %v536 = vld [vmem:[#allocation9 + $0x8c] sm:$0xf]
        %v537 = vld [vmem:[#allocation9 + $0x90] sm:$0xff]
        %v538 = vld [vmem:[#allocation9 + $0x98] sm:$0xf]
        %v539 = vld [vmem:[#allocation9 + $0x9c] sm:$0xff]
        %v540 = vld [vmem:[#allocation9 + $0xa4] sm:$0xf]
        %v541 = vld [vmem:[#allocation9 + $0xa8] sm:$0xff]
        %v542 = vld [vmem:[#allocation9 + $0xb0] sm:$0xf]
        %v543 = vld [vmem:[#allocation9 + $0xb4] sm:$0xff]
        %v544 = vld [vmem:[#allocation9 + $0xbc] sm:$0xf]
        %v577 = vunpack.c.l.b16 %v513
        %v578 = vunpack.c.h.b16 %v513
        %v579 = vunpack.c.l.b16 %v514
        %v580 = vunpack.c.l.b16 %v515
        %v581 = vunpack.c.h.b16 %v515
        %v582 = vunpack.c.l.b16 %v516
        %v583 = vunpack.c.l.b16 %v517
        %v584 = vunpack.c.h.b16 %v517
        %v585 = vunpack.c.l.b16 %v518
        %v586 = vunpack.c.l.b16 %v519
        %v587 = vunpack.c.h.b16 %v519
        %v588 = vunpack.c.l.b16 %v520
        %v589 = vunpack.c.l.b16 %v521
        %v590 = vunpack.c.h.b16 %v521
        %v591 = vunpack.c.l.b16 %v522
        %v592 = vunpack.c.l.b16 %v523
        %v593 = vunpack.c.h.b16 %v523
        %v594 = vunpack.c.l.b16 %v524
        %v595 = vunpack.c.l.b16 %v525
        %v596 = vunpack.c.h.b16 %v525
        %v597 = vunpack.c.l.b16 %v526
        %v598 = vunpack.c.l.b16 %v527
        %v599 = vunpack.c.h.b16 %v527
        %v600 = vunpack.c.l.b16 %v528
        %v601 = vunpack.c.l.b16 %v529
        %v602 = vunpack.c.h.b16 %v529
        %v603 = vunpack.c.l.b16 %v530
        %v604 = vunpack.c.l.b16 %v531
        %v605 = vunpack.c.h.b16 %v531
        %v606 = vunpack.c.l.b16 %v532
        %v607 = vunpack.c.l.b16 %v533
        %v608 = vunpack.c.h.b16 %v533
        %v609 = vunpack.c.l.b16 %v534
        %v610 = vunpack.c.l.b16 %v535
        %v611 = vunpack.c.h.b16 %v535
        %v612 = vunpack.c.l.b16 %v536
        %v613 = vunpack.c.l.b16 %v537
        %v614 = vunpack.c.h.b16 %v537
        %v615 = vunpack.c.l.b16 %v538
        %v616 = vunpack.c.l.b16 %v539
        %v617 = vunpack.c.h.b16 %v539
        %v618 = vunpack.c.l.b16 %v540
        %v619 = vunpack.c.l.b16 %v541
        %v620 = vunpack.c.h.b16 %v541
        %v621 = vunpack.c.l.b16 %v542
        %v622 = vunpack.c.l.b16 %v543
        %v623 = vunpack.c.h.b16 %v543
        %v624 = vunpack.c.l.b16 %v544
        %v625 = vpack.c.b16 %v580, %v577
        %v626 = vpack.c.b16 %v581, %v578
        %v627 = vpack.c.b16 %v582, %v579
        %v628 = vpack.c.b16 %v586, %v583
        %v629 = vpack.c.b16 %v587, %v584
        %v630 = vpack.c.b16 %v588, %v585
        %v631 = vpack.c.b16 %v592, %v589
        %v632 = vpack.c.b16 %v593, %v590
        %v633 = vpack.c.b16 %v594, %v591
        %v634 = vpack.c.b16 %v598, %v595
        %v635 = vpack.c.b16 %v599, %v596
        %v636 = vpack.c.b16 %v600, %v597
        %v637 = vpack.c.b16 %v604, %v601
        %v638 = vpack.c.b16 %v605, %v602
        %v639 = vpack.c.b16 %v606, %v603
        %v640 = vpack.c.b16 %v610, %v607
        %v641 = vpack.c.b16 %v611, %v608
        %v642 = vpack.c.b16 %v612, %v609
        %v643 = vpack.c.b16 %v616, %v613
        %v644 = vpack.c.b16 %v617, %v614
        %v645 = vpack.c.b16 %v618, %v615
        %v646 = vpack.c.b16 %v622, %v619
        %v647 = vpack.c.b16 %v623, %v620
        %v648 = vpack.c.b16 %v624, %v621
        %673 = vmatprep.subr.bf16.mxu0 %v647
        %674 = vmatpush1.bf16.msra.mxu0 %v646
        %675 = vmatprep.subr.bf16.mxu0 %v644
        %676 = vmatpush1.bf16.msra.mxu0 %v643
        %677 = vmatprep.subr.bf16.mxu0 %v641
        %678 = vmatpush1.bf16.msra.mxu0 %v640
        %679 = vmatprep.subr.bf16.mxu0 %v638
        %680 = vmatpush1.bf16.msra.mxu0 %v637
        %681 = vmatprep.subr.bf16.mxu0 %v635
        %682 = vmatpush1.bf16.msra.mxu0 %v634
        %683 = vmatprep.subr.bf16.mxu0 %v632
        %684 = vmatpush1.bf16.msra.mxu0 %v631
        %685 = vmatprep.subr.bf16.mxu0 %v629
        %686 = vmatpush1.bf16.msra.mxu0 %v628
        %687 = vmatprep.subr.bf16.mxu0 %v626
        %688 = vmatpush1.bf16.msra.mxu0 %v625
        %689 = vmatprep.subr.bf16.mxu0 0
        %690 = vmatpush2.bf16.msra.mxu0 0
        %691 = vmatprep.subr.bf16.mxu0 0
        %692 = vmatpush2.bf16.msra.mxu0 0
        %693 = vmatprep.subr.bf16.mxu0 0
        %694 = vmatpush2.bf16.msra.mxu0 0
        %695 = vmatprep.subr.bf16.mxu0 0
        %696 = vmatpush2.bf16.msra.mxu0 0
        %697 = vmatprep.subr.bf16.mxu0 0
        %698 = vmatpush2.bf16.msra.mxu0 0
        %699 = vmatprep.subr.bf16.mxu0 0
        %700 = vmatpush2.bf16.msra.mxu0 0
        %701 = vmatprep.subr.bf16.mxu0 0
        %702 = vmatpush2.bf16.msra.mxu0 0
        %703 = vmatprep.subr.bf16.mxu0 0
        %704 = vmatpush2.bf16.msra.mxu0 0
        %705 = vmatprep.mubr.bf16.mxu0 0
        %706 = vmatmul.mubr.bf16.gmra.mxu0 %v512
        %v707 = vpop.f32.mrf.mxu0
        %v708 = vadd.f32 0.0, %v707
        %v709 = vpop.f32.mrf.mxu0
        %v710 = vadd.f32 0.0, %v709
        %v711 = vpop.f32.mrf.mxu0
        %v712 = vpop.f32.mrf.mxu0
        %713 = vdwg.mxu0
        %714 = vmatprep.subr.bf16.mxu0 0
        %715 = vmatpush1.bf16.msra.mxu0 %v648
        %716 = vmatprep.subr.bf16.mxu0 0
        %717 = vmatpush1.bf16.msra.mxu0 %v645
        %718 = vmatprep.subr.bf16.mxu0 0
        %719 = vmatpush1.bf16.msra.mxu0 %v642
        %720 = vmatprep.subr.bf16.mxu0 0
        %721 = vmatpush1.bf16.msra.mxu0 %v639
        %722 = vmatprep.subr.bf16.mxu0 0
        %723 = vmatpush1.bf16.msra.mxu0 %v636
        %724 = vmatprep.subr.bf16.mxu0 0
        %725 = vmatpush1.bf16.msra.mxu0 %v633
        %726 = vmatprep.subr.bf16.mxu0 0
        %727 = vmatpush1.bf16.msra.mxu0 %v630
        %728 = vmatprep.subr.bf16.mxu0 0
        %729 = vmatpush1.bf16.msra.mxu0 %v627
        %730 = vmatprep.subr.bf16.mxu0 0
        %731 = vmatpush2.bf16.msra.mxu0 0
        %732 = vmatprep.subr.bf16.mxu0 0
        %733 = vmatpush2.bf16.msra.mxu0 0
        %734 = vmatprep.subr.bf16.mxu0 0
        %735 = vmatpush2.bf16.msra.mxu0 0
        %736 = vmatprep.subr.bf16.mxu0 0
        %737 = vmatpush2.bf16.msra.mxu0 0
        %738 = vmatprep.subr.bf16.mxu0 0
        %739 = vmatpush2.bf16.msra.mxu0 0
        %740 = vmatprep.subr.bf16.mxu0 0
        %741 = vmatpush2.bf16.msra.mxu0 0
        %742 = vmatprep.subr.bf16.mxu0 0
        %743 = vmatpush2.bf16.msra.mxu0 0
        %744 = vmatprep.subr.bf16.mxu0 0
        %745 = vmatpush2.bf16.msra.mxu0 0
        %746 = vmatprep.mubr.bf16.mxu0 0
        %747 = vmatmul.mubr.bf16.gmra.mxu0 %v512
        %v748 = vpop.f32.mrf.mxu0
        %v749 = vadd.f32 0.0, %v748
        %v750 = vpop.f32.mrf.mxu0
        %v751 = vpop.f32.mrf.mxu0
        %v752 = vpop.f32.mrf.mxu0
        %753 = vdwg.mxu0
        %v754 = vpack.c.bf16 %v708, %v708
        %v755 = vpack.c.bf16 %v710, %v710
        %v756 = vpack.c.bf16 %v749, %v749
        %vm757 = vcmask 261120
        %v759 = vsel %vm757, %v754, 0
        %v762 = vsel %vm757, %v755, 0
        %764 = vmatprep.subr.bf16.mxu0 0
        %765 = vmatpush1.bf16.xpose.msra.mxu0 0
        %766 = vmatprep.subr.bf16.mxu0 0
        %767 = vmatpush1.bf16.xpose.msra.mxu0 0
        %768 = vmatprep.subr.bf16.mxu0 0
        %769 = vmatpush1.bf16.xpose.msra.mxu0 0
        %770 = vmatprep.subr.bf16.mxu0 0
        %771 = vmatpush1.bf16.xpose.msra.mxu0 0
        %772 = vmatprep.subr.bf16.mxu0 0
        %773 = vmatpush1.bf16.xpose.msra.mxu0 0
        %774 = vmatprep.subr.bf16.mxu0 0
        %775 = vmatpush1.bf16.xpose.msra.mxu0 0
        %776 = vmatprep.subr.bf16.mxu0 0
        %777 = vmatpush1.bf16.xpose.msra.mxu0 0
        %778 = vmatprep.subr.bf16.mxu0 0
        %779 = vmatpush1.bf16.xpose.msra.mxu0 %v762
        %780 = vmatprep.subr.bf16.mxu0 0
        %781 = vmatpush2.bf16.xpose.msra.mxu0 0
        %782 = vmatprep.subr.bf16.mxu0 0
        %783 = vmatpush2.bf16.xpose.msra.mxu0 0
        %784 = vmatprep.subr.bf16.mxu0 0
        %785 = vmatpush2.bf16.xpose.msra.mxu0 0
        %786 = vmatprep.subr.bf16.mxu0 0
        %787 = vmatpush2.bf16.xpose.msra.mxu0 0
        %788 = vmatprep.subr.bf16.mxu0 0
        %789 = vmatpush2.bf16.xpose.msra.mxu0 0
        %790 = vmatprep.subr.bf16.mxu0 0
        %791 = vmatpush2.bf16.xpose.msra.mxu0 0
        %792 = vmatprep.subr.bf16.mxu0 0
        %793 = vmatpush2.bf16.xpose.msra.mxu0 0
        %794 = vmatprep.subr.bf16.mxu0 0
        %795 = vmatpush2.bf16.xpose.msra.mxu0 0
        %796 = vmatprep.mubr.bf16.mxu0 0
        %797 = vmatmul.mubr.bf16.gmra.mxu0 %v759
        %v798 = vpop.f32.mrf.mxu0
        %v799 = vadd.f32 0.0, %v798
        %v800 = vpop.f32.mrf.mxu0
        %v801 = vpop.f32.mrf.mxu0
        %v802 = vpop.f32.mrf.mxu0
        %803 = vdwg.mxu0
        %vm804 = vcmask 64512
        %v805 = vsel %vm804, %v799, -inf
        %806 = vmax.xlane.f32.xlu0 %v805
        %v807 = vpop.xlane.xlu0 %806
        %v808 = vsub.f32 %v799, %v807
        %v809 = vmul.f32 %v808, 1.442695
        %v810 = vpow.pop %v809
        %v811 = vsel %vm804, %v810, 0.0
        %812 = vadd.xlane.f32.xlu0 %v811
        %v813 = vpop.xlane.xlu0 %812
        %v814 = vrcp.pop %v813
        %v815 = vmul.f32 %v810, %v814
        %v816 = vpack.c.bf16 %v815, %v815
        %v818 = vsel %vm804, %v816, 0
        %vm820 = vcmask 1043456
        %v822 = vsel %vm820, %v756, 0
        %824 = vmatprep.subr.bf16.mxu0 0
        %825 = vmatpush1.bf16.msra.mxu0 0
        %826 = vmatprep.subr.bf16.mxu0 0
        %827 = vmatpush1.bf16.msra.mxu0 0
        %828 = vmatprep.subr.bf16.mxu0 0
        %829 = vmatpush1.bf16.msra.mxu0 0
        %830 = vmatprep.subr.bf16.mxu0 0
        %831 = vmatpush1.bf16.msra.mxu0 0
        %832 = vmatprep.subr.bf16.mxu0 0
        %833 = vmatpush1.bf16.msra.mxu0 0
        %834 = vmatprep.subr.bf16.mxu0 0
        %835 = vmatpush1.bf16.msra.mxu0 0
        %836 = vmatprep.subr.bf16.mxu0 0
        %837 = vmatpush1.bf16.msra.mxu0 0
        %838 = vmatprep.subr.bf16.mxu0 0
        %839 = vmatpush1.bf16.msra.mxu0 %v822
        %840 = vmatprep.subr.bf16.mxu0 0
        %841 = vmatpush2.bf16.msra.mxu0 0
        %842 = vmatprep.subr.bf16.mxu0 0
        %843 = vmatpush2.bf16.msra.mxu0 0
        %844 = vmatprep.subr.bf16.mxu0 0
        %845 = vmatpush2.bf16.msra.mxu0 0
        %846 = vmatprep.subr.bf16.mxu0 0
        %847 = vmatpush2.bf16.msra.mxu0 0
        %848 = vmatprep.subr.bf16.mxu0 0
        %849 = vmatpush2.bf16.msra.mxu0 0
        %850 = vmatprep.subr.bf16.mxu0 0
        %851 = vmatpush2.bf16.msra.mxu0 0
        %852 = vmatprep.subr.bf16.mxu0 0
        %853 = vmatpush2.bf16.msra.mxu0 0
        %854 = vmatprep.subr.bf16.mxu0 0
        %855 = vmatpush2.bf16.msra.mxu0 0
        %856 = vmatprep.mubr.bf16.mxu0 0
        %857 = vmatmul.mubr.bf16.gmra.mxu0 %v818
        %v858 = vpop.f32.mrf.mxu0
        %v859 = vadd.f32 0.0, %v858
        %v860 = vpop.f32.mrf.mxu0
        %v861 = vpop.f32.mrf.mxu0
        %v862 = vpop.f32.mrf.mxu0
        %863 = vdwg.mxu0
        %v864 = vpack.c.bf16 %v859, %v859
        %v865 = vld [vmem:[#allocation10] sm:$0xf]
        %v866 = vld [vmem:[#allocation10 + $0x4] sm:$0xf]
        %v867 = vld [vmem:[#allocation10 + $0x8] sm:$0xf]
        %v868 = vld [vmem:[#allocation10 + $0xc] sm:$0xf]
        %870 = vrot.lane.b32.xlu0 %v754, 96
        %v871 = vpop.permute.xlu0 %870
        %873 = vrot.lane.b32.xlu0 %v755, 96
        %v874 = vpop.permute.xlu0 %873
        %v876 = vsel %vm757, %v871, 0
        %v879 = vsel %vm757, %v874, 0
        %881 = vmatprep.subr.bf16.mxu0 0
        %882 = vmatpush1.bf16.xpose.msra.mxu0 0
        %883 = vmatprep.subr.bf16.mxu0 0
        %884 = vmatpush1.bf16.xpose.msra.mxu0 0
        %885 = vmatprep.subr.bf16.mxu0 0
        %886 = vmatpush1.bf16.xpose.msra.mxu0 0
        %887 = vmatprep.subr.bf16.mxu0 0
        %888 = vmatpush1.bf16.xpose.msra.mxu0 0
        %889 = vmatprep.subr.bf16.mxu0 0
        %890 = vmatpush1.bf16.xpose.msra.mxu0 0
        %891 = vmatprep.subr.bf16.mxu0 0
        %892 = vmatpush1.bf16.xpose.msra.mxu0 0
        %893 = vmatprep.subr.bf16.mxu0 0
        %894 = vmatpush1.bf16.xpose.msra.mxu0 0
        %895 = vmatprep.subr.bf16.mxu0 0
        %896 = vmatpush1.bf16.xpose.msra.mxu0 %v879
        %897 = vmatprep.subr.bf16.mxu0 0
        %898 = vmatpush2.bf16.xpose.msra.mxu0 0
        %899 = vmatprep.subr.bf16.mxu0 0
        %900 = vmatpush2.bf16.xpose.msra.mxu0 0
        %901 = vmatprep.subr.bf16.mxu0 0
        %902 = vmatpush2.bf16.xpose.msra.mxu0 0
        %903 = vmatprep.subr.bf16.mxu0 0
        %904 = vmatpush2.bf16.xpose.msra.mxu0 0
        %905 = vmatprep.subr.bf16.mxu0 0
        %906 = vmatpush2.bf16.xpose.msra.mxu0 0
        %907 = vmatprep.subr.bf16.mxu0 0
        %908 = vmatpush2.bf16.xpose.msra.mxu0 0
        %909 = vmatprep.subr.bf16.mxu0 0
        %910 = vmatpush2.bf16.xpose.msra.mxu0 0
        %911 = vmatprep.subr.bf16.mxu0 0
        %912 = vmatpush2.bf16.xpose.msra.mxu0 0
        %913 = vmatprep.mubr.bf16.mxu0 0
        %914 = vmatmul.mubr.bf16.gmra.mxu0 %v876
        %v915 = vpop.f32.mrf.mxu0
        %v916 = vadd.f32 0.0, %v915
        %v917 = vpop.f32.mrf.mxu0
        %v918 = vpop.f32.mrf.mxu0
        %v919 = vpop.f32.mrf.mxu0
        %920 = vdwg.mxu0
        %v921 = vsel %vm804, %v916, -inf
        %922 = vmax.xlane.f32.xlu0 %v921
        %v923 = vpop.xlane.xlu0 %922
        %v924 = vsub.f32 %v916, %v923
        %v925 = vmul.f32 %v924, 1.442695
        %v926 = vpow.pop %v925
        %v927 = vsel %vm804, %v926, 0.0
        %928 = vadd.xlane.f32.xlu0 %v927
        %v929 = vpop.xlane.xlu0 %928
        %v930 = vrcp.pop %v929
        %v931 = vmul.f32 %v926, %v930
        %v932 = vpack.c.bf16 %v931, %v931
        %934 = vrot.lane.b32.xlu0 %v756, 96
        %v935 = vpop.permute.xlu0 %934
        %v937 = vsel %vm804, %v932, 0
        %v940 = vsel %vm820, %v935, 0
        %942 = vmatprep.subr.bf16.mxu0 0
        %943 = vmatpush1.bf16.msra.mxu0 0
        %944 = vmatprep.subr.bf16.mxu0 0
        %945 = vmatpush1.bf16.msra.mxu0 0
        %946 = vmatprep.subr.bf16.mxu0 0
        %947 = vmatpush1.bf16.msra.mxu0 0
        %948 = vmatprep.subr.bf16.mxu0 0
        %949 = vmatpush1.bf16.msra.mxu0 0
        %950 = vmatprep.subr.bf16.mxu0 0
        %951 = vmatpush1.bf16.msra.mxu0 0
        %952 = vmatprep.subr.bf16.mxu0 0
        %953 = vmatpush1.bf16.msra.mxu0 0
        %954 = vmatprep.subr.bf16.mxu0 0
        %955 = vmatpush1.bf16.msra.mxu0 0
        %956 = vmatprep.subr.bf16.mxu0 0
        %957 = vmatpush1.bf16.msra.mxu0 %v940
        %958 = vmatprep.subr.bf16.mxu0 0
        %959 = vmatpush2.bf16.msra.mxu0 0
        %960 = vmatprep.subr.bf16.mxu0 0
        %961 = vmatpush2.bf16.msra.mxu0 0
        %962 = vmatprep.subr.bf16.mxu0 0
        %963 = vmatpush2.bf16.msra.mxu0 0
        %964 = vmatprep.subr.bf16.mxu0 0
        %965 = vmatpush2.bf16.msra.mxu0 0
        %966 = vmatprep.subr.bf16.mxu0 0
        %967 = vmatpush2.bf16.msra.mxu0 0
        %968 = vmatprep.subr.bf16.mxu0 0
        %969 = vmatpush2.bf16.msra.mxu0 0
        %970 = vmatprep.subr.bf16.mxu0 0
        %971 = vmatpush2.bf16.msra.mxu0 0
        %972 = vmatprep.subr.bf16.mxu0 0
        %973 = vmatpush2.bf16.msra.mxu0 0
        %974 = vmatprep.mubr.bf16.mxu0 0
        %975 = vmatmul.mubr.bf16.gmra.mxu0 %v937
        %v976 = vpop.f32.mrf.mxu0
        %v977 = vadd.f32 0.0, %v976
        %v978 = vpop.f32.mrf.mxu0
        %v979 = vpop.f32.mrf.mxu0
        %v980 = vpop.f32.mrf.mxu0
        %981 = vdwg.mxu0
        %v982 = vpack.c.bf16 %v977, %v977
        %v983 = vld [vmem:[#allocation10 + $0x10] sm:$0xf]
        %v984 = vld [vmem:[#allocation10 + $0x14] sm:$0xf]
        %v985 = vld [vmem:[#allocation10 + $0x18] sm:$0xf]
        %v986 = vld [vmem:[#allocation10 + $0x1c] sm:$0xf]
        %v991 = vunpack.c.l.b16 %v983
        %v992 = vunpack.c.l.b16 %v984
        %v993 = vunpack.c.l.b16 %v985
        %v994 = vunpack.c.l.b16 %v986
        %v995 = vpack.c.b16 %v992, %v991
        %v996 = vpack.c.b16 %v994, %v993
        %v1000 = vsel %vm757, %v982, 0
        %1002 = vmatprep.subr.bf16.mxu0 0
        %1003 = vmatpush1.bf16.msra.mxu0 0
        %1004 = vmatprep.subr.bf16.mxu0 0
        %1005 = vmatpush1.bf16.msra.mxu0 0
        %1006 = vmatprep.subr.bf16.mxu0 0
        %1007 = vmatpush1.bf16.msra.mxu0 0
        %1008 = vmatprep.subr.bf16.mxu0 0
        %1009 = vmatpush1.bf16.msra.mxu0 0
        %1010 = vmatprep.subr.bf16.mxu0 0
        %1011 = vmatpush1.bf16.msra.mxu0 0
        %1012 = vmatprep.subr.bf16.mxu0 0
        %1013 = vmatpush1.bf16.msra.mxu0 0
        %1014 = vmatprep.subr.bf16.mxu0 0
        %1015 = vmatpush1.bf16.msra.mxu0 %v996
        %1016 = vmatprep.subr.bf16.mxu0 0
        %1017 = vmatpush1.bf16.msra.mxu0 %v995
        %1018 = vmatprep.subr.bf16.mxu0 0
        %1019 = vmatpush2.bf16.msra.mxu0 0
        %1020 = vmatprep.subr.bf16.mxu0 0
        %1021 = vmatpush2.bf16.msra.mxu0 0
        %1022 = vmatprep.subr.bf16.mxu0 0
        %1023 = vmatpush2.bf16.msra.mxu0 0
        %1024 = vmatprep.subr.bf16.mxu0 0
        %1025 = vmatpush2.bf16.msra.mxu0 0
        %1026 = vmatprep.subr.bf16.mxu0 0
        %1027 = vmatpush2.bf16.msra.mxu0 0
        %1028 = vmatprep.subr.bf16.mxu0 0
        %1029 = vmatpush2.bf16.msra.mxu0 0
        %1030 = vmatprep.subr.bf16.mxu0 0
        %1031 = vmatpush2.bf16.msra.mxu0 0
        %1032 = vmatprep.subr.bf16.mxu0 0
        %1033 = vmatpush2.bf16.msra.mxu0 0
        %1034 = vmatprep.mubr.bf16.mxu0 0
        %1035 = vmatmul.mubr.bf16.gmra.mxu0 %v1000
        %v1036 = vpop.f32.mrf.mxu0
        %v1037 = vadd.f32 0.0, %v1036
        %v1038 = vpop.f32.mrf.mxu0
        %v1039 = vpop.f32.mrf.mxu0
        %v1040 = vpop.f32.mrf.mxu0
        %1041 = vdwg.mxu0
        %v1046 = vunpack.c.l.b16 %v865
        %v1047 = vunpack.c.l.b16 %v866
        %v1048 = vunpack.c.l.b16 %v867
        %v1049 = vunpack.c.l.b16 %v868
        %v1050 = vpack.c.b16 %v1047, %v1046
        %v1051 = vpack.c.b16 %v1049, %v1048
        %v1055 = vsel %vm757, %v864, 0
        %1057 = vmatprep.subr.bf16.mxu0 0
        %1058 = vmatpush1.bf16.msra.mxu0 0
        %1059 = vmatprep.subr.bf16.mxu0 0
        %1060 = vmatpush1.bf16.msra.mxu0 0
        %1061 = vmatprep.subr.bf16.mxu0 0
        %1062 = vmatpush1.bf16.msra.mxu0 0
        %1063 = vmatprep.subr.bf16.mxu0 0
        %1064 = vmatpush1.bf16.msra.mxu0 0
        %1065 = vmatprep.subr.bf16.mxu0 0
        %1066 = vmatpush1.bf16.msra.mxu0 0
        %1067 = vmatprep.subr.bf16.mxu0 0
        %1068 = vmatpush1.bf16.msra.mxu0 0
        %1069 = vmatprep.subr.bf16.mxu0 0
        %1070 = vmatpush1.bf16.msra.mxu0 %v1051
        %1071 = vmatprep.subr.bf16.mxu0 0
        %1072 = vmatpush1.bf16.msra.mxu0 %v1050
        %1073 = vmatprep.subr.bf16.mxu0 0
        %1074 = vmatpush2.bf16.msra.mxu0 0
        %1075 = vmatprep.subr.bf16.mxu0 0
        %1076 = vmatpush2.bf16.msra.mxu0 0
        %1077 = vmatprep.subr.bf16.mxu0 0
        %1078 = vmatpush2.bf16.msra.mxu0 0
        %1079 = vmatprep.subr.bf16.mxu0 0
        %1080 = vmatpush2.bf16.msra.mxu0 0
        %1081 = vmatprep.subr.bf16.mxu0 0
        %1082 = vmatpush2.bf16.msra.mxu0 0
        %1083 = vmatprep.subr.bf16.mxu0 0
        %1084 = vmatpush2.bf16.msra.mxu0 0
        %1085 = vmatprep.subr.bf16.mxu0 0
        %1086 = vmatpush2.bf16.msra.mxu0 0
        %1087 = vmatprep.subr.bf16.mxu0 0
        %1088 = vmatpush2.bf16.msra.mxu0 0
        %1089 = vmatprep.mubr.bf16.mxu0 0
        %1090 = vmatmul.mubr.bf16.gmra.mxu0 %v1055
        %v1091 = vpop.f32.mrf.mxu0
        %v1092 = vadd.f32 %v1037, %v1091
        %v1093 = vpop.f32.mrf.mxu0
        %v1094 = vpop.f32.mrf.mxu0
        %v1095 = vpop.f32.mrf.mxu0
        %1096 = vdwg.mxu0
        %1097 = vrot.lane.b32.xlu0 %v754, 64
        %v1098 = vpop.permute.xlu0 %1097
        %1099 = vrot.lane.b32.xlu0 %v755, 64
        %v1100 = vpop.permute.xlu0 %1099
        %v1102 = vsel %vm757, %v1098, 0
        %v1105 = vsel %vm757, %v1100, 0
        %1107 = vmatprep.subr.bf16.mxu0 0
        %1108 = vmatpush1.bf16.xpose.msra.mxu0 0
        %1109 = vmatprep.subr.bf16.mxu0 0
        %1110 = vmatpush1.bf16.xpose.msra.mxu0 0
        %1111 = vmatprep.subr.bf16.mxu0 0
        %1112 = vmatpush1.bf16.xpose.msra.mxu0 0
        %1113 = vmatprep.subr.bf16.mxu0 0
        %1114 = vmatpush1.bf16.xpose.msra.mxu0 0
        %1115 = vmatprep.subr.bf16.mxu0 0
        %1116 = vmatpush1.bf16.xpose.msra.mxu0 0
        %1117 = vmatprep.subr.bf16.mxu0 0
        %1118 = vmatpush1.bf16.xpose.msra.mxu0 0
        %1119 = vmatprep.subr.bf16.mxu0 0
        %1120 = vmatpush1.bf16.xpose.msra.mxu0 0
        %1121 = vmatprep.subr.bf16.mxu0 0
        %1122 = vmatpush1.bf16.xpose.msra.mxu0 %v1105
        %1123 = vmatprep.subr.bf16.mxu0 0
        %1124 = vmatpush2.bf16.xpose.msra.mxu0 0
        %1125 = vmatprep.subr.bf16.mxu0 0
        %1126 = vmatpush2.bf16.xpose.msra.mxu0 0
        %1127 = vmatprep.subr.bf16.mxu0 0
        %1128 = vmatpush2.bf16.xpose.msra.mxu0 0
        %1129 = vmatprep.subr.bf16.mxu0 0
        %1130 = vmatpush2.bf16.xpose.msra.mxu0 0
        %1131 = vmatprep.subr.bf16.mxu0 0
        %1132 = vmatpush2.bf16.xpose.msra.mxu0 0
        %1133 = vmatprep.subr.bf16.mxu0 0
        %1134 = vmatpush2.bf16.xpose.msra.mxu0 0
        %1135 = vmatprep.subr.bf16.mxu0 0
        %1136 = vmatpush2.bf16.xpose.msra.mxu0 0
        %1137 = vmatprep.subr.bf16.mxu0 0
        %1138 = vmatpush2.bf16.xpose.msra.mxu0 0
        %1139 = vmatprep.mubr.bf16.mxu0 0
        %1140 = vmatmul.mubr.bf16.gmra.mxu0 %v1102
        %v1141 = vpop.f32.mrf.mxu0
        %v1142 = vadd.f32 0.0, %v1141
        %v1143 = vpop.f32.mrf.mxu0
        %v1144 = vpop.f32.mrf.mxu0
        %v1145 = vpop.f32.mrf.mxu0
        %1146 = vdwg.mxu0
        %v1147 = vsel %vm804, %v1142, -inf
        %1148 = vmax.xlane.f32.xlu0 %v1147
        %v1149 = vpop.xlane.xlu0 %1148
        %v1150 = vsub.f32 %v1142, %v1149
        %v1151 = vmul.f32 %v1150, 1.442695
        %v1152 = vpow.pop %v1151
        %v1153 = vsel %vm804, %v1152, 0.0
        %1154 = vadd.xlane.f32.xlu0 %v1153
        %v1155 = vpop.xlane.xlu0 %1154
        %v1156 = vrcp.pop %v1155
        %v1157 = vmul.f32 %v1152, %v1156
        %v1158 = vpack.c.bf16 %v1157, %v1157
        %1159 = vrot.lane.b32.xlu0 %v756, 64
        %v1160 = vpop.permute.xlu0 %1159
        %v1162 = vsel %vm804, %v1158, 0
        %v1165 = vsel %vm820, %v1160, 0
        %1167 = vmatprep.subr.bf16.mxu0 0
        %1168 = vmatpush1.bf16.msra.mxu0 0
        %1169 = vmatprep.subr.bf16.mxu0 0
        %1170 = vmatpush1.bf16.msra.mxu0 0
        %1171 = vmatprep.subr.bf16.mxu0 0
        %1172 = vmatpush1.bf16.msra.mxu0 0
        %1173 = vmatprep.subr.bf16.mxu0 0
        %1174 = vmatpush1.bf16.msra.mxu0 0
        %1175 = vmatprep.subr.bf16.mxu0 0
        %1176 = vmatpush1.bf16.msra.mxu0 0
        %1177 = vmatprep.subr.bf16.mxu0 0
        %1178 = vmatpush1.bf16.msra.mxu0 0
        %1179 = vmatprep.subr.bf16.mxu0 0
        %1180 = vmatpush1.bf16.msra.mxu0 0
        %1181 = vmatprep.subr.bf16.mxu0 0
        %1182 = vmatpush1.bf16.msra.mxu0 %v1165
        %1183 = vmatprep.subr.bf16.mxu0 0
        %1184 = vmatpush2.bf16.msra.mxu0 0
        %1185 = vmatprep.subr.bf16.mxu0 0
        %1186 = vmatpush2.bf16.msra.mxu0 0
        %1187 = vmatprep.subr.bf16.mxu0 0
        %1188 = vmatpush2.bf16.msra.mxu0 0
        %1189 = vmatprep.subr.bf16.mxu0 0
        %1190 = vmatpush2.bf16.msra.mxu0 0
        %1191 = vmatprep.subr.bf16.mxu0 0
        %1192 = vmatpush2.bf16.msra.mxu0 0
        %1193 = vmatprep.subr.bf16.mxu0 0
        %1194 = vmatpush2.bf16.msra.mxu0 0
        %1195 = vmatprep.subr.bf16.mxu0 0
        %1196 = vmatpush2.bf16.msra.mxu0 0
        %1197 = vmatprep.subr.bf16.mxu0 0
        %1198 = vmatpush2.bf16.msra.mxu0 0
        %1199 = vmatprep.mubr.bf16.mxu0 0
        %1200 = vmatmul.mubr.bf16.gmra.mxu0 %v1162
        %v1201 = vpop.f32.mrf.mxu0
        %v1202 = vadd.f32 0.0, %v1201
        %v1203 = vpop.f32.mrf.mxu0
        %v1204 = vpop.f32.mrf.mxu0
        %v1205 = vpop.f32.mrf.mxu0
        %1206 = vdwg.mxu0
        %v1207 = vpack.c.bf16 %v1202, %v1202
        %v1208 = vld [vmem:[#allocation10 + $0x20] sm:$0xf]
        %v1209 = vld [vmem:[#allocation10 + $0x24] sm:$0xf]
        %v1210 = vld [vmem:[#allocation10 + $0x28] sm:$0xf]
        %v1211 = vld [vmem:[#allocation10 + $0x2c] sm:$0xf]
        %v1216 = vunpack.c.l.b16 %v1208
        %v1217 = vunpack.c.l.b16 %v1209
        %v1218 = vunpack.c.l.b16 %v1210
        %v1219 = vunpack.c.l.b16 %v1211
        %v1220 = vpack.c.b16 %v1217, %v1216
        %v1221 = vpack.c.b16 %v1219, %v1218
        %v1225 = vsel %vm757, %v1207, 0
        %1227 = vmatprep.subr.bf16.mxu0 0
        %1228 = vmatpush1.bf16.msra.mxu0 0
        %1229 = vmatprep.subr.bf16.mxu0 0
        %1230 = vmatpush1.bf16.msra.mxu0 0
        %1231 = vmatprep.subr.bf16.mxu0 0
        %1232 = vmatpush1.bf16.msra.mxu0 0
        %1233 = vmatprep.subr.bf16.mxu0 0
        %1234 = vmatpush1.bf16.msra.mxu0 0
        %1235 = vmatprep.subr.bf16.mxu0 0
        %1236 = vmatpush1.bf16.msra.mxu0 0
        %1237 = vmatprep.subr.bf16.mxu0 0
        %1238 = vmatpush1.bf16.msra.mxu0 0
        %1239 = vmatprep.subr.bf16.mxu0 0
        %1240 = vmatpush1.bf16.msra.mxu0 %v1221
        %1241 = vmatprep.subr.bf16.mxu0 0
        %1242 = vmatpush1.bf16.msra.mxu0 %v1220
        %1243 = vmatprep.subr.bf16.mxu0 0
        %1244 = vmatpush2.bf16.msra.mxu0 0
        %1245 = vmatprep.subr.bf16.mxu0 0
        %1246 = vmatpush2.bf16.msra.mxu0 0
        %1247 = vmatprep.subr.bf16.mxu0 0
        %1248 = vmatpush2.bf16.msra.mxu0 0
        %1249 = vmatprep.subr.bf16.mxu0 0
        %1250 = vmatpush2.bf16.msra.mxu0 0
        %1251 = vmatprep.subr.bf16.mxu0 0
        %1252 = vmatpush2.bf16.msra.mxu0 0
        %1253 = vmatprep.subr.bf16.mxu0 0
        %1254 = vmatpush2.bf16.msra.mxu0 0
        %1255 = vmatprep.subr.bf16.mxu0 0
        %1256 = vmatpush2.bf16.msra.mxu0 0
        %1257 = vmatprep.subr.bf16.mxu0 0
        %1258 = vmatpush2.bf16.msra.mxu0 0
        %1259 = vmatprep.mubr.bf16.mxu0 0
        %1260 = vmatmul.mubr.bf16.gmra.mxu0 %v1225
        %v1261 = vpop.f32.mrf.mxu0
        %v1262 = vadd.f32 0.0, %v1261
        %v1263 = vpop.f32.mrf.mxu0
        %v1264 = vpop.f32.mrf.mxu0
        %v1265 = vpop.f32.mrf.mxu0
        %1266 = vdwg.mxu0
        %v1267 = vadd.f32 %v1092, %v1262
        %1268 = vrot.lane.b32.xlu0 %v754, 32
        %v1269 = vpop.permute.xlu0 %1268
        %1270 = vrot.lane.b32.xlu0 %v755, 32
        %v1271 = vpop.permute.xlu0 %1270
        %v1273 = vsel %vm757, %v1269, 0
        %v1276 = vsel %vm757, %v1271, 0
        %1278 = vmatprep.subr.bf16.mxu0 0
        %1279 = vmatpush1.bf16.xpose.msra.mxu0 0
        %1280 = vmatprep.subr.bf16.mxu0 0
        %1281 = vmatpush1.bf16.xpose.msra.mxu0 0
        %1282 = vmatprep.subr.bf16.mxu0 0
        %1283 = vmatpush1.bf16.xpose.msra.mxu0 0
        %1284 = vmatprep.subr.bf16.mxu0 0
        %1285 = vmatpush1.bf16.xpose.msra.mxu0 0
        %1286 = vmatprep.subr.bf16.mxu0 0
        %1287 = vmatpush1.bf16.xpose.msra.mxu0 0
        %1288 = vmatprep.subr.bf16.mxu0 0
        %1289 = vmatpush1.bf16.xpose.msra.mxu0 0
        %1290 = vmatprep.subr.bf16.mxu0 0
        %1291 = vmatpush1.bf16.xpose.msra.mxu0 0
        %1292 = vmatprep.subr.bf16.mxu0 0
        %1293 = vmatpush1.bf16.xpose.msra.mxu0 %v1276
        %1294 = vmatprep.subr.bf16.mxu0 0
        %1295 = vmatpush2.bf16.xpose.msra.mxu0 0
        %1296 = vmatprep.subr.bf16.mxu0 0
        %1297 = vmatpush2.bf16.xpose.msra.mxu0 0
        %1298 = vmatprep.subr.bf16.mxu0 0
        %1299 = vmatpush2.bf16.xpose.msra.mxu0 0
        %1300 = vmatprep.subr.bf16.mxu0 0
        %1301 = vmatpush2.bf16.xpose.msra.mxu0 0
        %1302 = vmatprep.subr.bf16.mxu0 0
        %1303 = vmatpush2.bf16.xpose.msra.mxu0 0
        %1304 = vmatprep.subr.bf16.mxu0 0
        %1305 = vmatpush2.bf16.xpose.msra.mxu0 0
        %1306 = vmatprep.subr.bf16.mxu0 0
        %1307 = vmatpush2.bf16.xpose.msra.mxu0 0
        %1308 = vmatprep.subr.bf16.mxu0 0
        %1309 = vmatpush2.bf16.xpose.msra.mxu0 0
        %1310 = vmatprep.mubr.bf16.mxu0 0
        %1311 = vmatmul.mubr.bf16.gmra.mxu0 %v1273
        %v1312 = vpop.f32.mrf.mxu0
        %v1313 = vadd.f32 0.0, %v1312
        %v1314 = vpop.f32.mrf.mxu0
        %v1315 = vpop.f32.mrf.mxu0
        %v1316 = vpop.f32.mrf.mxu0
        %1317 = vdwg.mxu0
        %v1318 = vsel %vm804, %v1313, -inf
        %1319 = vmax.xlane.f32.xlu0 %v1318
        %v1320 = vpop.xlane.xlu0 %1319
        %v1321 = vsub.f32 %v1313, %v1320
        %v1322 = vmul.f32 %v1321, 1.442695
        %v1323 = vpow.pop %v1322
        %v1324 = vsel %vm804, %v1323, 0.0
        %1325 = vadd.xlane.f32.xlu0 %v1324
        %v1326 = vpop.xlane.xlu0 %1325
        %v1327 = vrcp.pop %v1326
        %v1328 = vmul.f32 %v1323, %v1327
        %v1329 = vpack.c.bf16 %v1328, %v1328
        %1330 = vrot.lane.b32.xlu0 %v756, 32
        %v1331 = vpop.permute.xlu0 %1330
        %v1333 = vsel %vm804, %v1329, 0
        %v1336 = vsel %vm820, %v1331, 0
        %1338 = vmatprep.subr.bf16.mxu0 0
        %1339 = vmatpush1.bf16.msra.mxu0 0
        %1340 = vmatprep.subr.bf16.mxu0 0
        %1341 = vmatpush1.bf16.msra.mxu0 0
        %1342 = vmatprep.subr.bf16.mxu0 0
        %1343 = vmatpush1.bf16.msra.mxu0 0
        %1344 = vmatprep.subr.bf16.mxu0 0
        %1345 = vmatpush1.bf16.msra.mxu0 0
        %1346 = vmatprep.subr.bf16.mxu0 0
        %1347 = vmatpush1.bf16.msra.mxu0 0
        %1348 = vmatprep.subr.bf16.mxu0 0
        %1349 = vmatpush1.bf16.msra.mxu0 0
        %1350 = vmatprep.subr.bf16.mxu0 0
        %1351 = vmatpush1.bf16.msra.mxu0 0
        %1352 = vmatprep.subr.bf16.mxu0 0
        %1353 = vmatpush1.bf16.msra.mxu0 %v1336
        %1354 = vmatprep.subr.bf16.mxu0 0
        %1355 = vmatpush2.bf16.msra.mxu0 0
        %1356 = vmatprep.subr.bf16.mxu0 0
        %1357 = vmatpush2.bf16.msra.mxu0 0
        %1358 = vmatprep.subr.bf16.mxu0 0
        %1359 = vmatpush2.bf16.msra.mxu0 0
        %1360 = vmatprep.subr.bf16.mxu0 0
        %1361 = vmatpush2.bf16.msra.mxu0 0
        %1362 = vmatprep.subr.bf16.mxu0 0
        %1363 = vmatpush2.bf16.msra.mxu0 0
        %1364 = vmatprep.subr.bf16.mxu0 0
        %1365 = vmatpush2.bf16.msra.mxu0 0
        %1366 = vmatprep.subr.bf16.mxu0 0
        %1367 = vmatpush2.bf16.msra.mxu0 0
        %1368 = vmatprep.subr.bf16.mxu0 0
        %1369 = vmatpush2.bf16.msra.mxu0 0
        %1370 = vmatprep.mubr.bf16.mxu0 0
        %1371 = vmatmul.mubr.bf16.gmra.mxu0 %v1333
        %v1372 = vpop.f32.mrf.mxu0
        %v1373 = vadd.f32 0.0, %v1372
        %v1374 = vpop.f32.mrf.mxu0
        %v1375 = vpop.f32.mrf.mxu0
        %v1376 = vpop.f32.mrf.mxu0
        %1377 = vdwg.mxu0
        %v1378 = vpack.c.bf16 %v1373, %v1373
        %v1379 = vld [vmem:[#allocation10 + $0x30] sm:$0xf]
        %v1380 = vld [vmem:[#allocation10 + $0x34] sm:$0xf]
        %v1381 = vld [vmem:[#allocation10 + $0x38] sm:$0xf]
        %v1382 = vld [vmem:[#allocation10 + $0x3c] sm:$0xf]
        %v1387 = vunpack.c.l.b16 %v1379
        %v1388 = vunpack.c.l.b16 %v1380
        %v1389 = vunpack.c.l.b16 %v1381
        %v1390 = vunpack.c.l.b16 %v1382
        %v1391 = vpack.c.b16 %v1388, %v1387
        %v1392 = vpack.c.b16 %v1390, %v1389
        %v1396 = vsel %vm757, %v1378, 0
        %1398 = vmatprep.subr.bf16.mxu0 0
        %1399 = vmatpush1.bf16.msra.mxu0 0
        %1400 = vmatprep.subr.bf16.mxu0 0
        %1401 = vmatpush1.bf16.msra.mxu0 0
        %1402 = vmatprep.subr.bf16.mxu0 0
        %1403 = vmatpush1.bf16.msra.mxu0 0
        %1404 = vmatprep.subr.bf16.mxu0 0
        %1405 = vmatpush1.bf16.msra.mxu0 0
        %1406 = vmatprep.subr.bf16.mxu0 0
        %1407 = vmatpush1.bf16.msra.mxu0 0
        %1408 = vmatprep.subr.bf16.mxu0 0
        %1409 = vmatpush1.bf16.msra.mxu0 0
        %1410 = vmatprep.subr.bf16.mxu0 0
        %1411 = vmatpush1.bf16.msra.mxu0 %v1392
        %1412 = vmatprep.subr.bf16.mxu0 0
        %1413 = vmatpush1.bf16.msra.mxu0 %v1391
        %1414 = vmatprep.subr.bf16.mxu0 0
        %1415 = vmatpush2.bf16.msra.mxu0 0
        %1416 = vmatprep.subr.bf16.mxu0 0
        %1417 = vmatpush2.bf16.msra.mxu0 0
        %1418 = vmatprep.subr.bf16.mxu0 0
        %1419 = vmatpush2.bf16.msra.mxu0 0
        %1420 = vmatprep.subr.bf16.mxu0 0
        %1421 = vmatpush2.bf16.msra.mxu0 0
        %1422 = vmatprep.subr.bf16.mxu0 0
        %1423 = vmatpush2.bf16.msra.mxu0 0
        %1424 = vmatprep.subr.bf16.mxu0 0
        %1425 = vmatpush2.bf16.msra.mxu0 0
        %1426 = vmatprep.subr.bf16.mxu0 0
        %1427 = vmatpush2.bf16.msra.mxu0 0
        %1428 = vmatprep.subr.bf16.mxu0 0
        %1429 = vmatpush2.bf16.msra.mxu0 0
        %1430 = vmatprep.mubr.bf16.mxu0 0
        %1431 = vmatmul.mubr.bf16.gmra.mxu0 %v1396
        %v1432 = vpop.f32.mrf.mxu0
        %v1433 = vadd.f32 0.0, %v1432
        %v1434 = vpop.f32.mrf.mxu0
        %v1435 = vpop.f32.mrf.mxu0
        %v1436 = vpop.f32.mrf.mxu0
        %1437 = vdwg.mxu0
        %v1438 = vadd.f32 %v1267, %v1433
        %v1439 = vadd.f32 %v474, %v1438
        %1440 = vst [vmem:[%s472] sm:$0xff] %v1439
        %v1441 = vld [vmem:[%s5] sm:$0x1]
        %v1442 = vld [vmem:[%s6] sm:$0x1]
        %1443 = vadd.xlane.f32.xlu0 %v1439
        %v1444 = vpop.xlane.xlu0 %1443
        %v1445 = vmul.f32 %v1444, %v479
        %v1446 = vsub.f32 %v1439, %v1445
        %v1447 = vmul.f32 %v1446, %v1446
        %1448 = vadd.xlane.f32.xlu0 %v1447
        %v1449 = vpop.xlane.xlu0 %1448
        %v1450 = vmul.f32 %v1449, %v485
        %v1451 = vrsqrt.pop %v1450
        %v1452 = vmul.f32 %v1450, %v1451
        %vm1453 = vcmp.eq.f32.partialorder %v1450, inf
        %v1454 = vsel %vm1453, %v1450, %v1452
        %vm1455 = vcmp.eq.f32.partialorder %v1450, 0.0
        %v1456 = vand.u32 %v1450, 2147483648
        %v1457 = vsel %vm1455, %v1456, %v1454
        %v1458 = vadd.f32 %v1457, 1e-06
        %v1459 = vrcp.pop %v1458
        %v1460 = vmul.f32 1.0, %v1459
        %v1461 = vmul.f32 %v1446, %v1460
        %v1463 = vlaneseq
        %v1464 = vshrl.u32 %v1463, 7
        %v1465 = vsub.s32 0, %v1464
        %v1466 = vrot.slane %v1441, %v1465
        %v1468 = vmul.f32 %v1466, %v1461
        %v1470 = vlaneseq
        %v1471 = vshrl.u32 %v1470, 7
        %v1472 = vsub.s32 0, %v1471
        %v1473 = vrot.slane %v1442, %v1472
        %v1475 = vadd.f32 %v1468, %v1473
        %v1476 = vpack.c.bf16 %v1475, %v1475
        %vm1477 = vcmask 1040384
        %vm1478 = vsmask.f32 256
        %vm1479 = vmand %vm1477, %vm1478
        %v1480 = vld [vmem:[#allocation2] sm:$0x1]
        %v1481 = vsel %vm1479, 0, %v1480
        %1482 = vst [vmem:[#allocation2] sm:$0x1] %v1481
        %vm1483 = vsmask.f32 7938
        %vm1484 = vmand %vm1477, %vm1483
        %v1485 = vld [vmem:[#allocation2 + $0x4] sm:$0x1]
        %v1486 = vsel %vm1484, 0, %v1485
        %1487 = vst [vmem:[#allocation2 + $0x4] sm:$0x1] %v1486
        %v1489 = vunpack.c.l.b16 %v1476
        %v1490 = vpack.c.b16 %v1489, %v1489
        %v1492 = vshrl.u32 %v1490, 16
        %v1494 = vrot.slane %v1492, 7
        %v1495 = vshll.u32 %v1490, 16
        %v1497 = vor.u32 %v1494, %v1495
        %v1498 = vrot.slane %v1494, 4
        %vm1501 = vcmask 1043456
        %vm1502 = vmand %vm1501, %vm1483
        %v1503 = vld [vmem:[#allocation2] sm:$0xf]
        %v1504 = vsel %vm1502, %v1497, %v1503
        %1505 = vst [vmem:[#allocation2] sm:$0xf] %v1504
        %v1506 = vld [vmem:[#allocation2 + $0x4] sm:$0x1]
        %v1507 = vsel %vm1479, %v1498, %v1506
        %1508 = vst [vmem:[#allocation2 + $0x4] sm:$0x1] %v1507
        %v1509 = vld [vmem:[#allocation2] sm:$0xf]
        %v1510 = vld [vmem:[#allocation12] sm:$0xff]
        %v1511 = vld [vmem:[#allocation12 + $0x8] sm:$0xff]
        %v1512 = vld [vmem:[#allocation12 + $0x10] sm:$0xff]
        %v1513 = vld [vmem:[#allocation12 + $0x18] sm:$0xff]
        %v1514 = vld [vmem:[#allocation12 + $0x20] sm:$0xff]
        %v1515 = vld [vmem:[#allocation12 + $0x28] sm:$0xff]
        %v1516 = vld [vmem:[#allocation12 + $0x30] sm:$0xff]
        %v1517 = vld [vmem:[#allocation12 + $0x38] sm:$0xff]
        %v1518 = vld [vmem:[#allocation12 + $0x40] sm:$0xff]
        %v1519 = vld [vmem:[#allocation12 + $0x48] sm:$0xff]
        %v1520 = vld [vmem:[#allocation12 + $0x50] sm:$0xff]
        %v1521 = vld [vmem:[#allocation12 + $0x58] sm:$0xff]
        %v1522 = vld [vmem:[#allocation12 + $0x60] sm:$0xff]
        %v1523 = vld [vmem:[#allocation12 + $0x68] sm:$0xff]
        %v1524 = vld [vmem:[#allocation12 + $0x70] sm:$0xff]
        %v1525 = vld [vmem:[#allocation12 + $0x78] sm:$0xff]
        %v1526 = vld [vmem:[#allocation2 + $0x4] sm:$0x1]
        %s1527 = scalar_lea.vmem [#allocation12], 128
        %v1528 = vld [vmem:[%s1527] sm:$0xff]
        %v1529 = vld [vmem:[%s1527 + $0x8] sm:$0xff]
        %v1530 = vld [vmem:[%s1527 + $0x10] sm:$0xff]
        %v1531 = vld [vmem:[%s1527 + $0x18] sm:$0xff]
        %v1532 = vld [vmem:[%s1527 + $0x20] sm:$0xff]
        %v1533 = vld [vmem:[%s1527 + $0x28] sm:$0xff]
        %v1534 = vld [vmem:[%s1527 + $0x30] sm:$0xff]
        %v1535 = vld [vmem:[%s1527 + $0x38] sm:$0xff]
        %v1536 = vld [vmem:[%s1527 + $0x40] sm:$0xff]
        %v1537 = vld [vmem:[%s1527 + $0x48] sm:$0xff]
        %v1538 = vld [vmem:[%s1527 + $0x50] sm:$0xff]
        %v1539 = vld [vmem:[%s1527 + $0x58] sm:$0xff]
        %v1540 = vld [vmem:[%s1527 + $0x60] sm:$0xff]
        %v1541 = vld [vmem:[%s1527 + $0x68] sm:$0xff]
        %v1542 = vld [vmem:[%s1527 + $0x70] sm:$0xff]
        %v1543 = vld [vmem:[%s1527 + $0x78] sm:$0xff]
        %v1546 = vunpack.c.l.b16 %v1509
        %v1547 = vunpack.c.l.b16 %v1526
        %v1548 = vpack.c.b16 %v1547, %v1546
        %v1550 = vshrl.u32 %v1548, 16
        %v1552 = vshll.u32 %v1548, 16
        %v1554 = vrot.slane %v1552, 1
        %v1555 = vor.u32 %v1550, %v1554
        %v1573 = vunpack.c.l.b16 %v1528
        %v1574 = vunpack.c.h.b16 %v1528
        %v1575 = vunpack.c.l.b16 %v1529
        %v1576 = vunpack.c.h.b16 %v1529
        %v1577 = vunpack.c.l.b16 %v1530
        %v1578 = vunpack.c.h.b16 %v1530
        %v1579 = vunpack.c.l.b16 %v1531
        %v1580 = vunpack.c.h.b16 %v1531
        %v1581 = vunpack.c.l.b16 %v1532
        %v1582 = vunpack.c.h.b16 %v1532
        %v1583 = vunpack.c.l.b16 %v1533
        %v1584 = vunpack.c.h.b16 %v1533
        %v1585 = vunpack.c.l.b16 %v1534
        %v1586 = vunpack.c.h.b16 %v1534
        %v1587 = vunpack.c.l.b16 %v1535
        %v1588 = vunpack.c.h.b16 %v1535
        %v1589 = vunpack.c.l.b16 %v1536
        %v1590 = vunpack.c.h.b16 %v1536
        %v1591 = vunpack.c.l.b16 %v1537
        %v1592 = vunpack.c.h.b16 %v1537
        %v1593 = vunpack.c.l.b16 %v1538
        %v1594 = vunpack.c.h.b16 %v1538
        %v1595 = vunpack.c.l.b16 %v1539
        %v1596 = vunpack.c.h.b16 %v1539
        %v1597 = vunpack.c.l.b16 %v1540
        %v1598 = vunpack.c.h.b16 %v1540
        %v1599 = vunpack.c.l.b16 %v1541
        %v1600 = vunpack.c.h.b16 %v1541
        %v1601 = vunpack.c.l.b16 %v1542
        %v1602 = vunpack.c.h.b16 %v1542
        %v1603 = vunpack.c.l.b16 %v1543
        %v1604 = vunpack.c.h.b16 %v1543
        %v1605 = vpack.c.b16 %v1575, %v1573
        %v1606 = vpack.c.b16 %v1576, %v1574
        %v1607 = vpack.c.b16 %v1579, %v1577
        %v1608 = vpack.c.b16 %v1580, %v1578
        %v1609 = vpack.c.b16 %v1583, %v1581
        %v1610 = vpack.c.b16 %v1584, %v1582
        %v1611 = vpack.c.b16 %v1587, %v1585
        %v1612 = vpack.c.b16 %v1588, %v1586
        %v1613 = vpack.c.b16 %v1591, %v1589
        %v1614 = vpack.c.b16 %v1592, %v1590
        %v1615 = vpack.c.b16 %v1595, %v1593
        %v1616 = vpack.c.b16 %v1596, %v1594
        %v1617 = vpack.c.b16 %v1599, %v1597
        %v1618 = vpack.c.b16 %v1600, %v1598
        %v1619 = vpack.c.b16 %v1603, %v1601
        %v1620 = vpack.c.b16 %v1604, %v1602
        %1637 = vmatprep.subr.bf16.mxu0 %v1620
        %1638 = vmatpush1.bf16.msra.mxu0 %v1619
        %1639 = vmatprep.subr.bf16.mxu0 %v1618
        %1640 = vmatpush1.bf16.msra.mxu0 %v1617
        %1641 = vmatprep.subr.bf16.mxu0 %v1616
        %1642 = vmatpush1.bf16.msra.mxu0 %v1615
        %1643 = vmatprep.subr.bf16.mxu0 %v1614
        %1644 = vmatpush1.bf16.msra.mxu0 %v1613
        %1645 = vmatprep.subr.bf16.mxu0 %v1612
        %1646 = vmatpush1.bf16.msra.mxu0 %v1611
        %1647 = vmatprep.subr.bf16.mxu0 %v1610
        %1648 = vmatpush1.bf16.msra.mxu0 %v1609
        %1649 = vmatprep.subr.bf16.mxu0 %v1608
        %1650 = vmatpush1.bf16.msra.mxu0 %v1607
        %1651 = vmatprep.subr.bf16.mxu0 %v1606
        %1652 = vmatpush1.bf16.msra.mxu0 %v1605
        %1653 = vmatprep.subr.bf16.mxu0 0
        %1654 = vmatpush2.bf16.msra.mxu0 0
        %1655 = vmatprep.subr.bf16.mxu0 0
        %1656 = vmatpush2.bf16.msra.mxu0 0
        %1657 = vmatprep.subr.bf16.mxu0 0
        %1658 = vmatpush2.bf16.msra.mxu0 0
        %1659 = vmatprep.subr.bf16.mxu0 0
        %1660 = vmatpush2.bf16.msra.mxu0 0
        %1661 = vmatprep.subr.bf16.mxu0 0
        %1662 = vmatpush2.bf16.msra.mxu0 0
        %1663 = vmatprep.subr.bf16.mxu0 0
        %1664 = vmatpush2.bf16.msra.mxu0 0
        %1665 = vmatprep.subr.bf16.mxu0 0
        %1666 = vmatpush2.bf16.msra.mxu0 0
        %1667 = vmatprep.subr.bf16.mxu0 0
        %1668 = vmatpush2.bf16.msra.mxu0 0
        %1669 = vmatprep.mubr.bf16.mxu0 0
        %1670 = vmatmul.mubr.bf16.gmra.mxu0 %v1555
        %v1671 = vpop.f32.mrf.mxu0
        %v1672 = vadd.f32 0.0, %v1671
        %v1673 = vpop.f32.mrf.mxu0
        %v1674 = vadd.f32 0.0, %v1673
        %v1675 = vpop.f32.mrf.mxu0
        %v1676 = vpop.f32.mrf.mxu0
        %1677 = vdwg.mxu0
        %v1694 = vunpack.c.l.b16 %v1510
        %v1695 = vunpack.c.h.b16 %v1510
        %v1696 = vunpack.c.l.b16 %v1511
        %v1697 = vunpack.c.h.b16 %v1511
        %v1698 = vunpack.c.l.b16 %v1512
        %v1699 = vunpack.c.h.b16 %v1512
        %v1700 = vunpack.c.l.b16 %v1513
        %v1701 = vunpack.c.h.b16 %v1513
        %v1702 = vunpack.c.l.b16 %v1514
        %v1703 = vunpack.c.h.b16 %v1514
        %v1704 = vunpack.c.l.b16 %v1515
        %v1705 = vunpack.c.h.b16 %v1515
        %v1706 = vunpack.c.l.b16 %v1516
        %v1707 = vunpack.c.h.b16 %v1516
        %v1708 = vunpack.c.l.b16 %v1517
        %v1709 = vunpack.c.h.b16 %v1517
        %v1710 = vunpack.c.l.b16 %v1518
        %v1711 = vunpack.c.h.b16 %v1518
        %v1712 = vunpack.c.l.b16 %v1519
        %v1713 = vunpack.c.h.b16 %v1519
        %v1714 = vunpack.c.l.b16 %v1520
        %v1715 = vunpack.c.h.b16 %v1520
        %v1716 = vunpack.c.l.b16 %v1521
        %v1717 = vunpack.c.h.b16 %v1521
        %v1718 = vunpack.c.l.b16 %v1522
        %v1719 = vunpack.c.h.b16 %v1522
        %v1720 = vunpack.c.l.b16 %v1523
        %v1721 = vunpack.c.h.b16 %v1523
        %v1722 = vunpack.c.l.b16 %v1524
        %v1723 = vunpack.c.h.b16 %v1524
        %v1724 = vunpack.c.l.b16 %v1525
        %v1725 = vunpack.c.h.b16 %v1525
        %v1726 = vpack.c.b16 %v1696, %v1694
        %v1727 = vpack.c.b16 %v1697, %v1695
        %v1728 = vpack.c.b16 %v1700, %v1698
        %v1729 = vpack.c.b16 %v1701, %v1699
        %v1730 = vpack.c.b16 %v1704, %v1702
        %v1731 = vpack.c.b16 %v1705, %v1703
        %v1732 = vpack.c.b16 %v1708, %v1706
        %v1733 = vpack.c.b16 %v1709, %v1707
        %v1734 = vpack.c.b16 %v1712, %v1710
        %v1735 = vpack.c.b16 %v1713, %v1711
        %v1736 = vpack.c.b16 %v1716, %v1714
        %v1737 = vpack.c.b16 %v1717, %v1715
        %v1738 = vpack.c.b16 %v1720, %v1718
        %v1739 = vpack.c.b16 %v1721, %v1719
        %v1740 = vpack.c.b16 %v1724, %v1722
        %v1741 = vpack.c.b16 %v1725, %v1723
        %1758 = vmatprep.subr.bf16.mxu0 %v1741
        %1759 = vmatpush1.bf16.msra.mxu0 %v1740
        %1760 = vmatprep.subr.bf16.mxu0 %v1739
        %1761 = vmatpush1.bf16.msra.mxu0 %v1738
        %1762 = vmatprep.subr.bf16.mxu0 %v1737
        %1763 = vmatpush1.bf16.msra.mxu0 %v1736
        %1764 = vmatprep.subr.bf16.mxu0 %v1735
        %1765 = vmatpush1.bf16.msra.mxu0 %v1734
        %1766 = vmatprep.subr.bf16.mxu0 %v1733
        %1767 = vmatpush1.bf16.msra.mxu0 %v1732
        %1768 = vmatprep.subr.bf16.mxu0 %v1731
        %1769 = vmatpush1.bf16.msra.mxu0 %v1730
        %1770 = vmatprep.subr.bf16.mxu0 %v1729
        %1771 = vmatpush1.bf16.msra.mxu0 %v1728
        %1772 = vmatprep.subr.bf16.mxu0 %v1727
        %1773 = vmatpush1.bf16.msra.mxu0 %v1726
        %1774 = vmatprep.subr.bf16.mxu0 0
        %1775 = vmatpush2.bf16.msra.mxu0 0
        %1776 = vmatprep.subr.bf16.mxu0 0
        %1777 = vmatpush2.bf16.msra.mxu0 0
        %1778 = vmatprep.subr.bf16.mxu0 0
        %1779 = vmatpush2.bf16.msra.mxu0 0
        %1780 = vmatprep.subr.bf16.mxu0 0
        %1781 = vmatpush2.bf16.msra.mxu0 0
        %1782 = vmatprep.subr.bf16.mxu0 0
        %1783 = vmatpush2.bf16.msra.mxu0 0
        %1784 = vmatprep.subr.bf16.mxu0 0
        %1785 = vmatpush2.bf16.msra.mxu0 0
        %1786 = vmatprep.subr.bf16.mxu0 0
        %1787 = vmatpush2.bf16.msra.mxu0 0
        %1788 = vmatprep.subr.bf16.mxu0 0
        %1789 = vmatpush2.bf16.msra.mxu0 0
        %1790 = vmatprep.mubr.bf16.mxu0 0
        %1791 = vmatmul.mubr.bf16.gmra.mxu0 %v1509
        %v1792 = vpop.f32.mrf.mxu0
        %v1793 = vadd.f32 %v1672, %v1792
        %v1794 = vpop.f32.mrf.mxu0
        %v1795 = vadd.f32 %v1674, %v1794
        %v1796 = vpop.f32.mrf.mxu0
        %v1797 = vpop.f32.mrf.mxu0
        %1798 = vdwg.mxu0
        %v1799 = vld [vmem:[#allocation2] sm:$0xe]
        %s1800 = scalar_lea.vmem [#allocation12], 256
        %v1801 = vld [vmem:[%s1800] sm:$0xff]
        %v1802 = vld [vmem:[%s1800 + $0x8] sm:$0xff]
        %v1803 = vld [vmem:[%s1800 + $0x10] sm:$0xff]
        %v1804 = vld [vmem:[%s1800 + $0x18] sm:$0xff]
        %v1805 = vld [vmem:[%s1800 + $0x20] sm:$0xff]
        %v1806 = vld [vmem:[%s1800 + $0x28] sm:$0xff]
        %v1807 = vld [vmem:[%s1800 + $0x30] sm:$0xff]
        %v1808 = vld [vmem:[%s1800 + $0x38] sm:$0xff]
        %v1809 = vld [vmem:[%s1800 + $0x40] sm:$0xff]
        %v1810 = vld [vmem:[%s1800 + $0x48] sm:$0xff]
        %v1811 = vld [vmem:[%s1800 + $0x50] sm:$0xff]
        %v1812 = vld [vmem:[%s1800 + $0x58] sm:$0xff]
        %v1813 = vld [vmem:[%s1800 + $0x60] sm:$0xff]
        %v1814 = vld [vmem:[%s1800 + $0x68] sm:$0xff]
        %v1815 = vld [vmem:[%s1800 + $0x70] sm:$0xff]
        %v1816 = vld [vmem:[%s1800 + $0x78] sm:$0xff]
        %v1818 = vunpack.c.l.b16 %v1799
        %v1819 = vpack.c.b16 %v1547, %v1818
        %v1820 = vrot.slane %v1819, 1
        %v1838 = vunpack.c.l.b16 %v1801
        %v1839 = vunpack.c.h.b16 %v1801
        %v1840 = vunpack.c.l.b16 %v1802
        %v1841 = vunpack.c.h.b16 %v1802
        %v1842 = vunpack.c.l.b16 %v1803
        %v1843 = vunpack.c.h.b16 %v1803
        %v1844 = vunpack.c.l.b16 %v1804
        %v1845 = vunpack.c.h.b16 %v1804
        %v1846 = vunpack.c.l.b16 %v1805
        %v1847 = vunpack.c.h.b16 %v1805
        %v1848 = vunpack.c.l.b16 %v1806
        %v1849 = vunpack.c.h.b16 %v1806
        %v1850 = vunpack.c.l.b16 %v1807
        %v1851 = vunpack.c.h.b16 %v1807
        %v1852 = vunpack.c.l.b16 %v1808
        %v1853 = vunpack.c.h.b16 %v1808
        %v1854 = vunpack.c.l.b16 %v1809
        %v1855 = vunpack.c.h.b16 %v1809
        %v1856 = vunpack.c.l.b16 %v1810
        %v1857 = vunpack.c.h.b16 %v1810
        %v1858 = vunpack.c.l.b16 %v1811
        %v1859 = vunpack.c.h.b16 %v1811
        %v1860 = vunpack.c.l.b16 %v1812
        %v1861 = vunpack.c.h.b16 %v1812
        %v1862 = vunpack.c.l.b16 %v1813
        %v1863 = vunpack.c.h.b16 %v1813
        %v1864 = vunpack.c.l.b16 %v1814
        %v1865 = vunpack.c.h.b16 %v1814
        %v1866 = vunpack.c.l.b16 %v1815
        %v1867 = vunpack.c.h.b16 %v1815
        %v1868 = vunpack.c.l.b16 %v1816
        %v1869 = vunpack.c.h.b16 %v1816
        %v1870 = vpack.c.b16 %v1840, %v1838
        %v1871 = vpack.c.b16 %v1841, %v1839
        %v1872 = vpack.c.b16 %v1844, %v1842
        %v1873 = vpack.c.b16 %v1845, %v1843
        %v1874 = vpack.c.b16 %v1848, %v1846
        %v1875 = vpack.c.b16 %v1849, %v1847
        %v1876 = vpack.c.b16 %v1852, %v1850
        %v1877 = vpack.c.b16 %v1853, %v1851
        %v1878 = vpack.c.b16 %v1856, %v1854
        %v1879 = vpack.c.b16 %v1857, %v1855
        %v1880 = vpack.c.b16 %v1860, %v1858
        %v1881 = vpack.c.b16 %v1861, %v1859
        %v1882 = vpack.c.b16 %v1864, %v1862
        %v1883 = vpack.c.b16 %v1865, %v1863
        %v1884 = vpack.c.b16 %v1868, %v1866
        %v1885 = vpack.c.b16 %v1869, %v1867
        %1902 = vmatprep.subr.bf16.mxu0 %v1885
        %1903 = vmatpush1.bf16.msra.mxu0 %v1884
        %1904 = vmatprep.subr.bf16.mxu0 %v1883
        %1905 = vmatpush1.bf16.msra.mxu0 %v1882
        %1906 = vmatprep.subr.bf16.mxu0 %v1881
        %1907 = vmatpush1.bf16.msra.mxu0 %v1880
        %1908 = vmatprep.subr.bf16.mxu0 %v1879
        %1909 = vmatpush1.bf16.msra.mxu0 %v1878
        %1910 = vmatprep.subr.bf16.mxu0 %v1877
        %1911 = vmatpush1.bf16.msra.mxu0 %v1876
        %1912 = vmatprep.subr.bf16.mxu0 %v1875
        %1913 = vmatpush1.bf16.msra.mxu0 %v1874
        %1914 = vmatprep.subr.bf16.mxu0 %v1873
        %1915 = vmatpush1.bf16.msra.mxu0 %v1872
        %1916 = vmatprep.subr.bf16.mxu0 %v1871
        %1917 = vmatpush1.bf16.msra.mxu0 %v1870
        %1918 = vmatprep.subr.bf16.mxu0 0
        %1919 = vmatpush2.bf16.msra.mxu0 0
        %1920 = vmatprep.subr.bf16.mxu0 0
        %1921 = vmatpush2.bf16.msra.mxu0 0
        %1922 = vmatprep.subr.bf16.mxu0 0
        %1923 = vmatpush2.bf16.msra.mxu0 0
        %1924 = vmatprep.subr.bf16.mxu0 0
        %1925 = vmatpush2.bf16.msra.mxu0 0
        %1926 = vmatprep.subr.bf16.mxu0 0
        %1927 = vmatpush2.bf16.msra.mxu0 0
        %1928 = vmatprep.subr.bf16.mxu0 0
        %1929 = vmatpush2.bf16.msra.mxu0 0
        %1930 = vmatprep.subr.bf16.mxu0 0
        %1931 = vmatpush2.bf16.msra.mxu0 0
        %1932 = vmatprep.subr.bf16.mxu0 0
        %1933 = vmatpush2.bf16.msra.mxu0 0
        %1934 = vmatprep.mubr.bf16.mxu0 0
        %1935 = vmatmul.mubr.bf16.gmra.mxu0 %v1820
        %v1936 = vpop.f32.mrf.mxu0
        %v1937 = vadd.f32 0.0, %v1936
        %v1938 = vpop.f32.mrf.mxu0
        %v1939 = vadd.f32 0.0, %v1938
        %v1940 = vpop.f32.mrf.mxu0
        %v1941 = vpop.f32.mrf.mxu0
        %1942 = vdwg.mxu0
        %v1943 = vadd.f32 %v1793, %v1937
        %v1944 = vadd.f32 %v1795, %v1939
        %v1945 = vld [vmem:[%s8] sm:$0x3]
        %v1947 = vlaneseq
        %v1948 = vshrl.u32 %v1947, 7
        %v1949 = vsub.s32 0, %v1948
        %v1950 = vrot.slane %v1945, %v1949
        %v1951 = vlaneseq
        %v1952 = vshrl.u32 %v1951, 7
        %v1953 = vsub.s32 1, %v1952
        %v1954 = vrot.slane %v1945, %v1953
        %v1957 = vadd.f32 %v1943, %v1950
        %v1958 = vadd.f32 %v1944, %v1954
        %v1959 = vmax.f32 %v1957, 0.0
        %v1960 = vmax.f32 %v1958, 0.0
        %v1961 = vpack.c.bf16 %v1959, %v1959
        %v1962 = vpack.c.bf16 %v1960, %v1960
        %vm1963 = vcmask 1044484
        %vm1964 = vsmask.f32 4352
        %vm1965 = vmand %vm1963, %vm1964
        %vm1966 = vmor %vm1965, %vm1479
        %v1967 = vld [vmem:[#allocation3] sm:$0x11]
        %v1968 = vsel %vm1966, 0, %v1967
        %1969 = vst [vmem:[#allocation3] sm:$0x11] %v1968
        %vm1970 = vsmask.f32 7954
        %vm1971 = vmand %vm1963, %vm1970
        %vm1972 = vmor %vm1971, %vm1484
        %v1973 = vld [vmem:[#allocation3 + $0x8] sm:$0x11]
        %v1974 = vsel %vm1972, 0, %v1973
        %1975 = vst [vmem:[#allocation3 + $0x8] sm:$0x11] %v1974
        %v1978 = vunpack.c.l.b16 %v1961
        %v1979 = vunpack.c.l.b16 %v1962
        %v1980 = vpack.c.b16 %v1979, %v1978
        %v1982 = vshrl.u32 %v1980, 16
        %v1984 = vrot.slane %v1982, 7
        %v1985 = vshll.u32 %v1980, 16
        %v1987 = vor.u32 %v1984, %v1985
        %v1988 = vrot.slane %v1984, 4
        %vm1991 = vcmask 1047556
        %vm1992 = vmand %vm1991, %vm1970
        %vm1993 = vmor %vm1992, %vm1502
        %v1994 = vld [vmem:[#allocation3] sm:$0xff]
        %v1995 = vsel %vm1993, %v1987, %v1994
        %1996 = vst [vmem:[#allocation3] sm:$0xff] %v1995
        %v1997 = vld [vmem:[#allocation3 + $0x8] sm:$0x11]
        %v1998 = vsel %vm1966, %v1988, %v1997
        %1999 = vst [vmem:[#allocation3 + $0x8] sm:$0x11] %v1998
        %v2000 = vld [vmem:[#allocation3] sm:$0xff]
        %v2001 = vld [vmem:[#allocation13] sm:$0xf]
        %v2002 = vld [vmem:[#allocation13 + $0x4] sm:$0xf]
        %v2003 = vld [vmem:[#allocation13 + $0x8] sm:$0xf]
        %v2004 = vld [vmem:[#allocation13 + $0xc] sm:$0xf]
        %v2005 = vld [vmem:[#allocation13 + $0x10] sm:$0xf]
        %v2006 = vld [vmem:[#allocation13 + $0x14] sm:$0xf]
        %v2007 = vld [vmem:[#allocation13 + $0x18] sm:$0xf]
        %v2008 = vld [vmem:[#allocation13 + $0x1c] sm:$0xf]
        %v2009 = vld [vmem:[#allocation13 + $0x20] sm:$0xf]
        %v2010 = vld [vmem:[#allocation13 + $0x24] sm:$0xf]
        %v2011 = vld [vmem:[#allocation13 + $0x28] sm:$0xf]
        %v2012 = vld [vmem:[#allocation13 + $0x2c] sm:$0xf]
        %v2013 = vld [vmem:[#allocation13 + $0x30] sm:$0xf]
        %v2014 = vld [vmem:[#allocation13 + $0x34] sm:$0xf]
        %v2015 = vld [vmem:[#allocation13 + $0x38] sm:$0xf]
        %v2016 = vld [vmem:[#allocation13 + $0x3c] sm:$0xf]
        %v2017 = vld [vmem:[#allocation13 + $0x40] sm:$0xf]
        %v2018 = vld [vmem:[#allocation13 + $0x44] sm:$0xf]
        %v2019 = vld [vmem:[#allocation13 + $0x48] sm:$0xf]
        %v2020 = vld [vmem:[#allocation13 + $0x4c] sm:$0xf]
        %v2021 = vld [vmem:[#allocation13 + $0x50] sm:$0xf]
        %v2022 = vld [vmem:[#allocation13 + $0x54] sm:$0xf]
        %v2023 = vld [vmem:[#allocation13 + $0x58] sm:$0xf]
        %v2024 = vld [vmem:[#allocation13 + $0x5c] sm:$0xf]
        %v2025 = vld [vmem:[#allocation13 + $0x60] sm:$0xf]
        %v2026 = vld [vmem:[#allocation13 + $0x64] sm:$0xf]
        %v2027 = vld [vmem:[#allocation13 + $0x68] sm:$0xf]
        %v2028 = vld [vmem:[#allocation13 + $0x6c] sm:$0xf]
        %v2029 = vld [vmem:[#allocation13 + $0x70] sm:$0xf]
        %v2030 = vld [vmem:[#allocation13 + $0x74] sm:$0xf]
        %v2031 = vld [vmem:[#allocation13 + $0x78] sm:$0xf]
        %v2032 = vld [vmem:[#allocation13 + $0x7c] sm:$0xf]
        %v2033 = vld [vmem:[#allocation3 + $0x8] sm:$0x11]
        %s2034 = scalar_lea.vmem [#allocation13], 128
        %v2035 = vld [vmem:[%s2034] sm:$0xf]
        %v2036 = vld [vmem:[%s2034 + $0x4] sm:$0xf]
        %v2037 = vld [vmem:[%s2034 + $0x8] sm:$0xf]
        %v2038 = vld [vmem:[%s2034 + $0xc] sm:$0xf]
        %v2039 = vld [vmem:[%s2034 + $0x10] sm:$0xf]
        %v2040 = vld [vmem:[%s2034 + $0x14] sm:$0xf]
        %v2041 = vld [vmem:[%s2034 + $0x18] sm:$0xf]
        %v2042 = vld [vmem:[%s2034 + $0x1c] sm:$0xf]
        %v2043 = vld [vmem:[%s2034 + $0x20] sm:$0xf]
        %v2044 = vld [vmem:[%s2034 + $0x24] sm:$0xf]
        %v2045 = vld [vmem:[%s2034 + $0x28] sm:$0xf]
        %v2046 = vld [vmem:[%s2034 + $0x2c] sm:$0xf]
        %v2047 = vld [vmem:[%s2034 + $0x30] sm:$0xf]
        %v2048 = vld [vmem:[%s2034 + $0x34] sm:$0xf]
        %v2049 = vld [vmem:[%s2034 + $0x38] sm:$0xf]
        %v2050 = vld [vmem:[%s2034 + $0x3c] sm:$0xf]
        %v2051 = vld [vmem:[%s2034 + $0x40] sm:$0xf]
        %v2052 = vld [vmem:[%s2034 + $0x44] sm:$0xf]
        %v2053 = vld [vmem:[%s2034 + $0x48] sm:$0xf]
        %v2054 = vld [vmem:[%s2034 + $0x4c] sm:$0xf]
        %v2055 = vld [vmem:[%s2034 + $0x50] sm:$0xf]
        %v2056 = vld [vmem:[%s2034 + $0x54] sm:$0xf]
        %v2057 = vld [vmem:[%s2034 + $0x58] sm:$0xf]
        %v2058 = vld [vmem:[%s2034 + $0x5c] sm:$0xf]
        %v2059 = vld [vmem:[%s2034 + $0x60] sm:$0xf]
        %v2060 = vld [vmem:[%s2034 + $0x64] sm:$0xf]
        %v2061 = vld [vmem:[%s2034 + $0x68] sm:$0xf]
        %v2062 = vld [vmem:[%s2034 + $0x6c] sm:$0xf]
        %v2063 = vld [vmem:[%s2034 + $0x70] sm:$0xf]
        %v2064 = vld [vmem:[%s2034 + $0x74] sm:$0xf]
        %v2065 = vld [vmem:[%s2034 + $0x78] sm:$0xf]
        %v2066 = vld [vmem:[%s2034 + $0x7c] sm:$0xf]
        %v2069 = vunpack.c.l.b16 %v2000
        %v2070 = vunpack.c.h.b16 %v2000
        %v2071 = vunpack.c.l.b16 %v2033
        %v2072 = vunpack.c.h.b16 %v2033
        %v2073 = vpack.c.b16 %v2071, %v2069
        %v2074 = vpack.c.b16 %v2072, %v2070
        %v2076 = vshrl.u32 %v2073, 16
        %v2078 = vshll.u32 %v2073, 16
        %v2080 = vrot.slane %v2078, 1
        %v2081 = vor.u32 %v2076, %v2080
        %v2083 = vshrl.u32 %v2074, 16
        %v2085 = vshll.u32 %v2074, 16
        %v2087 = vrot.slane %v2085, 1
        %v2088 = vor.u32 %v2083, %v2087
        %v2123 = vunpack.c.l.b16 %v2035
        %v2124 = vunpack.c.l.b16 %v2036
        %v2125 = vunpack.c.l.b16 %v2037
        %v2126 = vunpack.c.l.b16 %v2038
        %v2127 = vunpack.c.l.b16 %v2039
        %v2128 = vunpack.c.l.b16 %v2040
        %v2129 = vunpack.c.l.b16 %v2041
        %v2130 = vunpack.c.l.b16 %v2042
        %v2131 = vunpack.c.l.b16 %v2043
        %v2132 = vunpack.c.l.b16 %v2044
        %v2133 = vunpack.c.l.b16 %v2045
        %v2134 = vunpack.c.l.b16 %v2046
        %v2135 = vunpack.c.l.b16 %v2047
        %v2136 = vunpack.c.l.b16 %v2048
        %v2137 = vunpack.c.l.b16 %v2049
        %v2138 = vunpack.c.l.b16 %v2050
        %v2139 = vunpack.c.l.b16 %v2051
        %v2140 = vunpack.c.l.b16 %v2052
        %v2141 = vunpack.c.l.b16 %v2053
        %v2142 = vunpack.c.l.b16 %v2054
        %v2143 = vunpack.c.l.b16 %v2055
        %v2144 = vunpack.c.l.b16 %v2056
        %v2145 = vunpack.c.l.b16 %v2057
        %v2146 = vunpack.c.l.b16 %v2058
        %v2147 = vunpack.c.l.b16 %v2059
        %v2148 = vunpack.c.l.b16 %v2060
        %v2149 = vunpack.c.l.b16 %v2061
        %v2150 = vunpack.c.l.b16 %v2062
        %v2151 = vunpack.c.l.b16 %v2063
        %v2152 = vunpack.c.l.b16 %v2064
        %v2153 = vunpack.c.l.b16 %v2065
        %v2154 = vunpack.c.l.b16 %v2066
        %v2155 = vpack.c.b16 %v2124, %v2123
        %v2156 = vpack.c.b16 %v2126, %v2125
        %v2157 = vpack.c.b16 %v2128, %v2127
        %v2158 = vpack.c.b16 %v2130, %v2129
        %v2159 = vpack.c.b16 %v2132, %v2131
        %v2160 = vpack.c.b16 %v2134, %v2133
        %v2161 = vpack.c.b16 %v2136, %v2135
        %v2162 = vpack.c.b16 %v2138, %v2137
        %v2163 = vpack.c.b16 %v2140, %v2139
        %v2164 = vpack.c.b16 %v2142, %v2141
        %v2165 = vpack.c.b16 %v2144, %v2143
        %v2166 = vpack.c.b16 %v2146, %v2145
        %v2167 = vpack.c.b16 %v2148, %v2147
        %v2168 = vpack.c.b16 %v2150, %v2149
        %v2169 = vpack.c.b16 %v2152, %v2151
        %v2170 = vpack.c.b16 %v2154, %v2153
        %2187 = vmatprep.subr.bf16.mxu0 0
        %2188 = vmatpush1.bf16.msra.mxu0 %v2162
        %2189 = vmatprep.subr.bf16.mxu0 0
        %2190 = vmatpush1.bf16.msra.mxu0 %v2161
        %2191 = vmatprep.subr.bf16.mxu0 0
        %2192 = vmatpush1.bf16.msra.mxu0 %v2160
        %2193 = vmatprep.subr.bf16.mxu0 0
        %2194 = vmatpush1.bf16.msra.mxu0 %v2159
        %2195 = vmatprep.subr.bf16.mxu0 0
        %2196 = vmatpush1.bf16.msra.mxu0 %v2158
        %2197 = vmatprep.subr.bf16.mxu0 0
        %2198 = vmatpush1.bf16.msra.mxu0 %v2157
        %2199 = vmatprep.subr.bf16.mxu0 0
        %2200 = vmatpush1.bf16.msra.mxu0 %v2156
        %2201 = vmatprep.subr.bf16.mxu0 0
        %2202 = vmatpush1.bf16.msra.mxu0 %v2155
        %2203 = vmatprep.subr.bf16.mxu0 0
        %2204 = vmatpush2.bf16.msra.mxu0 %v2170
        %2205 = vmatprep.subr.bf16.mxu0 0
        %2206 = vmatpush2.bf16.msra.mxu0 %v2169
        %2207 = vmatprep.subr.bf16.mxu0 0
        %2208 = vmatpush2.bf16.msra.mxu0 %v2168
        %2209 = vmatprep.subr.bf16.mxu0 0
        %2210 = vmatpush2.bf16.msra.mxu0 %v2167
        %2211 = vmatprep.subr.bf16.mxu0 0
        %2212 = vmatpush2.bf16.msra.mxu0 %v2166
        %2213 = vmatprep.subr.bf16.mxu0 0
        %2214 = vmatpush2.bf16.msra.mxu0 %v2165
        %2215 = vmatprep.subr.bf16.mxu0 0
        %2216 = vmatpush2.bf16.msra.mxu0 %v2164
        %2217 = vmatprep.subr.bf16.mxu0 0
        %2218 = vmatpush2.bf16.msra.mxu0 %v2163
        %2219 = vmatprep.mubr.bf16.mxu0 %v2088
        %2220 = vmatmul.mubr.bf16.gmra.mxu0 %v2081
        %v2221 = vpop.f32.mrf.mxu0
        %v2222 = vadd.f32 0.0, %v2221
        %v2223 = vpop.f32.mrf.mxu0
        %v2224 = vpop.f32.mrf.mxu0
        %v2225 = vpop.f32.mrf.mxu0
        %2226 = vdwg.mxu0
        %v2227 = vpack.c.b16 %v2069, %v2069
        %v2228 = vpack.c.b16 %v2070, %v2070
        %v2263 = vunpack.c.l.b16 %v2001
        %v2264 = vunpack.c.l.b16 %v2002
        %v2265 = vunpack.c.l.b16 %v2003
        %v2266 = vunpack.c.l.b16 %v2004
        %v2267 = vunpack.c.l.b16 %v2005
        %v2268 = vunpack.c.l.b16 %v2006
        %v2269 = vunpack.c.l.b16 %v2007
        %v2270 = vunpack.c.l.b16 %v2008
        %v2271 = vunpack.c.l.b16 %v2009
        %v2272 = vunpack.c.l.b16 %v2010
        %v2273 = vunpack.c.l.b16 %v2011
        %v2274 = vunpack.c.l.b16 %v2012
        %v2275 = vunpack.c.l.b16 %v2013
        %v2276 = vunpack.c.l.b16 %v2014
        %v2277 = vunpack.c.l.b16 %v2015
        %v2278 = vunpack.c.l.b16 %v2016
        %v2279 = vunpack.c.l.b16 %v2017
        %v2280 = vunpack.c.l.b16 %v2018
        %v2281 = vunpack.c.l.b16 %v2019
        %v2282 = vunpack.c.l.b16 %v2020
        %v2283 = vunpack.c.l.b16 %v2021
        %v2284 = vunpack.c.l.b16 %v2022
        %v2285 = vunpack.c.l.b16 %v2023
        %v2286 = vunpack.c.l.b16 %v2024
        %v2287 = vunpack.c.l.b16 %v2025
        %v2288 = vunpack.c.l.b16 %v2026
        %v2289 = vunpack.c.l.b16 %v2027
        %v2290 = vunpack.c.l.b16 %v2028
        %v2291 = vunpack.c.l.b16 %v2029
        %v2292 = vunpack.c.l.b16 %v2030
        %v2293 = vunpack.c.l.b16 %v2031
        %v2294 = vunpack.c.l.b16 %v2032
        %v2295 = vpack.c.b16 %v2264, %v2263
        %v2296 = vpack.c.b16 %v2266, %v2265
        %v2297 = vpack.c.b16 %v2268, %v2267
        %v2298 = vpack.c.b16 %v2270, %v2269
        %v2299 = vpack.c.b16 %v2272, %v2271
        %v2300 = vpack.c.b16 %v2274, %v2273
        %v2301 = vpack.c.b16 %v2276, %v2275
        %v2302 = vpack.c.b16 %v2278, %v2277
        %v2303 = vpack.c.b16 %v2280, %v2279
        %v2304 = vpack.c.b16 %v2282, %v2281
        %v2305 = vpack.c.b16 %v2284, %v2283
        %v2306 = vpack.c.b16 %v2286, %v2285
        %v2307 = vpack.c.b16 %v2288, %v2287
        %v2308 = vpack.c.b16 %v2290, %v2289
        %v2309 = vpack.c.b16 %v2292, %v2291
        %v2310 = vpack.c.b16 %v2294, %v2293
        %2327 = vmatprep.subr.bf16.mxu0 0
        %2328 = vmatpush1.bf16.msra.mxu0 %v2302
        %2329 = vmatprep.subr.bf16.mxu0 0
        %2330 = vmatpush1.bf16.msra.mxu0 %v2301
        %2331 = vmatprep.subr.bf16.mxu0 0
        %2332 = vmatpush1.bf16.msra.mxu0 %v2300
        %2333 = vmatprep.subr.bf16.mxu0 0
        %2334 = vmatpush1.bf16.msra.mxu0 %v2299
        %2335 = vmatprep.subr.bf16.mxu0 0
        %2336 = vmatpush1.bf16.msra.mxu0 %v2298
        %2337 = vmatprep.subr.bf16.mxu0 0
        %2338 = vmatpush1.bf16.msra.mxu0 %v2297
        %2339 = vmatprep.subr.bf16.mxu0 0
        %2340 = vmatpush1.bf16.msra.mxu0 %v2296
        %2341 = vmatprep.subr.bf16.mxu0 0
        %2342 = vmatpush1.bf16.msra.mxu0 %v2295
        %2343 = vmatprep.subr.bf16.mxu0 0
        %2344 = vmatpush2.bf16.msra.mxu0 %v2310
        %2345 = vmatprep.subr.bf16.mxu0 0
        %2346 = vmatpush2.bf16.msra.mxu0 %v2309
        %2347 = vmatprep.subr.bf16.mxu0 0
        %2348 = vmatpush2.bf16.msra.mxu0 %v2308
        %2349 = vmatprep.subr.bf16.mxu0 0
        %2350 = vmatpush2.bf16.msra.mxu0 %v2307
        %2351 = vmatprep.subr.bf16.mxu0 0
        %2352 = vmatpush2.bf16.msra.mxu0 %v2306
        %2353 = vmatprep.subr.bf16.mxu0 0
        %2354 = vmatpush2.bf16.msra.mxu0 %v2305
        %2355 = vmatprep.subr.bf16.mxu0 0
        %2356 = vmatpush2.bf16.msra.mxu0 %v2304
        %2357 = vmatprep.subr.bf16.mxu0 0
        %2358 = vmatpush2.bf16.msra.mxu0 %v2303
        %2359 = vmatprep.mubr.bf16.mxu0 %v2228
        %2360 = vmatmul.mubr.bf16.gmra.mxu0 %v2227
        %v2361 = vpop.f32.mrf.mxu0
        %v2362 = vadd.f32 %v2222, %v2361
        %v2363 = vpop.f32.mrf.mxu0
        %v2364 = vpop.f32.mrf.mxu0
        %v2365 = vpop.f32.mrf.mxu0
        %2366 = vdwg.mxu0
        %v2367 = vld [vmem:[#allocation3] sm:$0xee]
        %s2368 = scalar_lea.vmem [#allocation13], 256
        %v2369 = vld [vmem:[%s2368] sm:$0xf]
        %v2370 = vld [vmem:[%s2368 + $0x4] sm:$0xf]
        %v2371 = vld [vmem:[%s2368 + $0x8] sm:$0xf]
        %v2372 = vld [vmem:[%s2368 + $0xc] sm:$0xf]
        %v2373 = vld [vmem:[%s2368 + $0x10] sm:$0xf]
        %v2374 = vld [vmem:[%s2368 + $0x14] sm:$0xf]
        %v2375 = vld [vmem:[%s2368 + $0x18] sm:$0xf]
        %v2376 = vld [vmem:[%s2368 + $0x1c] sm:$0xf]
        %v2377 = vld [vmem:[%s2368 + $0x20] sm:$0xf]
        %v2378 = vld [vmem:[%s2368 + $0x24] sm:$0xf]
        %v2379 = vld [vmem:[%s2368 + $0x28] sm:$0xf]
        %v2380 = vld [vmem:[%s2368 + $0x2c] sm:$0xf]
        %v2381 = vld [vmem:[%s2368 + $0x30] sm:$0xf]
        %v2382 = vld [vmem:[%s2368 + $0x34] sm:$0xf]
        %v2383 = vld [vmem:[%s2368 + $0x38] sm:$0xf]
        %v2384 = vld [vmem:[%s2368 + $0x3c] sm:$0xf]
        %v2385 = vld [vmem:[%s2368 + $0x40] sm:$0xf]
        %v2386 = vld [vmem:[%s2368 + $0x44] sm:$0xf]
        %v2387 = vld [vmem:[%s2368 + $0x48] sm:$0xf]
        %v2388 = vld [vmem:[%s2368 + $0x4c] sm:$0xf]
        %v2389 = vld [vmem:[%s2368 + $0x50] sm:$0xf]
        %v2390 = vld [vmem:[%s2368 + $0x54] sm:$0xf]
        %v2391 = vld [vmem:[%s2368 + $0x58] sm:$0xf]
        %v2392 = vld [vmem:[%s2368 + $0x5c] sm:$0xf]
        %v2393 = vld [vmem:[%s2368 + $0x60] sm:$0xf]
        %v2394 = vld [vmem:[%s2368 + $0x64] sm:$0xf]
        %v2395 = vld [vmem:[%s2368 + $0x68] sm:$0xf]
        %v2396 = vld [vmem:[%s2368 + $0x6c] sm:$0xf]
        %v2397 = vld [vmem:[%s2368 + $0x70] sm:$0xf]
        %v2398 = vld [vmem:[%s2368 + $0x74] sm:$0xf]
        %v2399 = vld [vmem:[%s2368 + $0x78] sm:$0xf]
        %v2400 = vld [vmem:[%s2368 + $0x7c] sm:$0xf]
        %v2402 = vunpack.c.l.b16 %v2367
        %v2403 = vunpack.c.h.b16 %v2367
        %v2404 = vpack.c.b16 %v2071, %v2402
        %v2405 = vpack.c.b16 %v2072, %v2403
        %v2406 = vrot.slane %v2404, 1
        %v2407 = vrot.slane %v2405, 1
        %v2442 = vunpack.c.l.b16 %v2369
        %v2443 = vunpack.c.l.b16 %v2370
        %v2444 = vunpack.c.l.b16 %v2371
        %v2445 = vunpack.c.l.b16 %v2372
        %v2446 = vunpack.c.l.b16 %v2373
        %v2447 = vunpack.c.l.b16 %v2374
        %v2448 = vunpack.c.l.b16 %v2375
        %v2449 = vunpack.c.l.b16 %v2376
        %v2450 = vunpack.c.l.b16 %v2377
        %v2451 = vunpack.c.l.b16 %v2378
        %v2452 = vunpack.c.l.b16 %v2379
        %v2453 = vunpack.c.l.b16 %v2380
        %v2454 = vunpack.c.l.b16 %v2381
        %v2455 = vunpack.c.l.b16 %v2382
        %v2456 = vunpack.c.l.b16 %v2383
        %v2457 = vunpack.c.l.b16 %v2384
        %v2458 = vunpack.c.l.b16 %v2385
        %v2459 = vunpack.c.l.b16 %v2386
        %v2460 = vunpack.c.l.b16 %v2387
        %v2461 = vunpack.c.l.b16 %v2388
        %v2462 = vunpack.c.l.b16 %v2389
        %v2463 = vunpack.c.l.b16 %v2390
        %v2464 = vunpack.c.l.b16 %v2391
        %v2465 = vunpack.c.l.b16 %v2392
        %v2466 = vunpack.c.l.b16 %v2393
        %v2467 = vunpack.c.l.b16 %v2394
        %v2468 = vunpack.c.l.b16 %v2395
        %v2469 = vunpack.c.l.b16 %v2396
        %v2470 = vunpack.c.l.b16 %v2397
        %v2471 = vunpack.c.l.b16 %v2398
        %v2472 = vunpack.c.l.b16 %v2399
        %v2473 = vunpack.c.l.b16 %v2400
        %v2474 = vpack.c.b16 %v2443, %v2442
        %v2475 = vpack.c.b16 %v2445, %v2444
        %v2476 = vpack.c.b16 %v2447, %v2446
        %v2477 = vpack.c.b16 %v2449, %v2448
        %v2478 = vpack.c.b16 %v2451, %v2450
        %v2479 = vpack.c.b16 %v2453, %v2452
        %v2480 = vpack.c.b16 %v2455, %v2454
        %v2481 = vpack.c.b16 %v2457, %v2456
        %v2482 = vpack.c.b16 %v2459, %v2458
        %v2483 = vpack.c.b16 %v2461, %v2460
        %v2484 = vpack.c.b16 %v2463, %v2462
        %v2485 = vpack.c.b16 %v2465, %v2464
        %v2486 = vpack.c.b16 %v2467, %v2466
        %v2487 = vpack.c.b16 %v2469, %v2468
        %v2488 = vpack.c.b16 %v2471, %v2470
        %v2489 = vpack.c.b16 %v2473, %v2472
        %2506 = vmatprep.subr.bf16.mxu0 0
        %2507 = vmatpush1.bf16.msra.mxu0 %v2481
        %2508 = vmatprep.subr.bf16.mxu0 0
        %2509 = vmatpush1.bf16.msra.mxu0 %v2480
        %2510 = vmatprep.subr.bf16.mxu0 0
        %2511 = vmatpush1.bf16.msra.mxu0 %v2479
        %2512 = vmatprep.subr.bf16.mxu0 0
        %2513 = vmatpush1.bf16.msra.mxu0 %v2478
        %2514 = vmatprep.subr.bf16.mxu0 0
        %2515 = vmatpush1.bf16.msra.mxu0 %v2477
        %2516 = vmatprep.subr.bf16.mxu0 0
        %2517 = vmatpush1.bf16.msra.mxu0 %v2476
        %2518 = vmatprep.subr.bf16.mxu0 0
        %2519 = vmatpush1.bf16.msra.mxu0 %v2475
        %2520 = vmatprep.subr.bf16.mxu0 0
        %2521 = vmatpush1.bf16.msra.mxu0 %v2474
        %2522 = vmatprep.subr.bf16.mxu0 0
        %2523 = vmatpush2.bf16.msra.mxu0 %v2489
        %2524 = vmatprep.subr.bf16.mxu0 0
        %2525 = vmatpush2.bf16.msra.mxu0 %v2488
        %2526 = vmatprep.subr.bf16.mxu0 0
        %2527 = vmatpush2.bf16.msra.mxu0 %v2487
        %2528 = vmatprep.subr.bf16.mxu0 0
        %2529 = vmatpush2.bf16.msra.mxu0 %v2486
        %2530 = vmatprep.subr.bf16.mxu0 0
        %2531 = vmatpush2.bf16.msra.mxu0 %v2485
        %2532 = vmatprep.subr.bf16.mxu0 0
        %2533 = vmatpush2.bf16.msra.mxu0 %v2484
        %2534 = vmatprep.subr.bf16.mxu0 0
        %2535 = vmatpush2.bf16.msra.mxu0 %v2483
        %2536 = vmatprep.subr.bf16.mxu0 0
        %2537 = vmatpush2.bf16.msra.mxu0 %v2482
        %2538 = vmatprep.mubr.bf16.mxu0 %v2407
        %2539 = vmatmul.mubr.bf16.gmra.mxu0 %v2406
        %v2540 = vpop.f32.mrf.mxu0
        %v2541 = vadd.f32 0.0, %v2540
        %v2542 = vpop.f32.mrf.mxu0
        %v2543 = vpop.f32.mrf.mxu0
        %v2544 = vpop.f32.mrf.mxu0
        %2545 = vdwg.mxu0
        %v2546 = vadd.f32 %v2362, %v2541
        %v2547 = vld [vmem:[%s10] sm:$0x1]
        %v2549 = vlaneseq
        %v2550 = vshrl.u32 %v2549, 7
        %v2551 = vsub.s32 0, %v2550
        %v2552 = vrot.slane %v2547, %v2551
        %v2554 = vadd.f32 %v2546, %v2552
        %v2555 = vmax.f32 %v2554, 0.0
        %v2556 = vld [vmem:[%s472] sm:$0xff]
        %v2557 = vadd.f32 %v2556, %v2555
        %2558 = vst [vmem:[%s472] sm:$0xff] %v2557
        %s2559 = sand.u32 %s275, 1
        %s2560 = scalar_lea.sflag [#allocation6], %s2559
        %s2561 = sand.u32 %s275, 1
        %s2562 = smul.addr %s2561, 8
        %s2563 = scalar_lea.vmem [#allocation15], %s2562
        // Predicated region
        $region89: #{tpu_custom_call.1} parent=63 // pred_check
          %p2564 = pneg %p285
        $region90: #{tpu_custom_call.1} parent=63 // pred_check_branch
          %2566 = sbr.rel (%p2564) target = $region92
        $region91: #{tpu_custom_call.1} parent=63 // pred_region
          %s2568 = ssub.s32 128, 128
          %2569 = vsyncadd %s2560, %s2568
          %s2570 = smul.addr %s31, 128
          %s2571 = scalar_lea.hbm %s11, %s2570
          %s2573 = sshll.u32 %s2563, 4
          %s2574 = int_to_ptr.vmem [resolvable:$true] %s2573
          %2576 = dma.vmem_to_hbm [thread:$0]  %s2574, 128, %s2571, %s2560
        $region92: #{tpu_custom_call.1} parent=63 // pred_fallthru
          _
      $region64: #{tpu_custom_call.1} parent=5 // pred_fallthru
        _
      %p2577 = scmp.le.s32.totalorder 2, %s26
      // Predicated region
      $region93: #{tpu_custom_call.1} parent=5 // pred_check
        %p2578 = pneg %p2577
      $region94: #{tpu_custom_call.1} parent=5 // pred_check_branch
        %2580 = sbr.rel (%p2578) target = $region96
      $region95: #{tpu_custom_call.1} parent=5 // pred_region
        %s2581 = ssub.s32 %s26, 2
        // Predicated region
        $region97: #{tpu_custom_call.1} parent=95 // pred_check
          %p2582 = pneg %p291
        $region98: #{tpu_custom_call.1} parent=95 // pred_check_branch
          %2584 = sbr.rel (%p2582) target = $region100
        $region99: #{tpu_custom_call.1} parent=95 // pred_region
          %s2585 = sand.u32 %s276, 1
          %s2586 = scalar_lea.sflag [#allocation6], %s2585
          %s2587 = sand.u32 %s276, 1
          %s2588 = smul.addr %s2587, 8
          %s2589 = scalar_lea.vmem [#allocation15], %s2588
          %2590 = dma.done %s2586, 128
        $region100: #{tpu_custom_call.1} parent=95 // pred_fallthru
          _
      $region96: #{tpu_custom_call.1} parent=5 // pred_fallthru
        _
    $region6: #{tpu_custom_call.1} parent=1 // loop_footer
      %s30 = sadd.s32 1, %s26
    $region7: #{tpu_custom_call.1} parent=1 // loop_footer_branch
      %25 = sbr.rel target = $region3
    $region8: #{tpu_custom_call.1} parent=1 // loop_exit
      _
    %2591 = vsyncpa [#allocation5], 1
    %s2592 = scalar_lea.sflag [#allocation5], 1
    %2593 = vsyncpa %s2592, 1
    %2594 = vsyncpa [#allocation8], 1
    %2595 = vsyncpa [#allocation11], 1
    %2596 = vsyncpa [#allocation14], 1
    %2597 = vsyncpa [#allocation6], 1
    %s2598 = scalar_lea.sflag [#allocation6], 1
    %2599 = vsyncpa %s2598, 1

</llo_original>
